<compile_context>
chip_gen: v7x
topology: tpu7x:2x2x1
jax: 0.10.0
libtpu: 0.0.40
codegen_flags: <defaults>
</compile_context>

<pallas_src>
import functools

import numpy as np
import jax
import jax.numpy as jnp
from jax import lax
from jax.experimental import pallas as pl
from jax.experimental.pallas import tpu as pltpu

_TIME_CHUNK = 8          # time steps per grid step (amortizes per-step grid overhead)


def _recurrence_kernel(rho, T_pad, TC, B, H,
                       xproj_ref, size_col_ref, size_row_ref, wh_ref, lin_ref,
                       w_ref,
                       h_sc, c_sc, hsf_sc, hsb_sc):
    """Merged fwd/bwd LSTM recurrence (time-chunked grid) + pooled-weight epilogue.

    xproj_ref : (TC, B, 8H) bf16  streamed x-projections (+bias), gate columns
                [i_f,i_b,f_f,f_b,o_f,o_b,g_f,g_b]; bwd columns pre-time-reversed.
    w_ref     : (T_pad, B) f32    rho-mixed pooling weights (written in the epilogue).
    """
    f32 = jnp.float32
    HH = 2 * H
    chunk = pl.program_id(0)

    @pl.when(chunk == 0)
    def _():
        h_sc[...] = jnp.zeros_like(h_sc)
        c_sc[...] = jnp.zeros_like(c_sc)

    # loop invariants, hoisted once per chunk
    wh = wh_ref[...]                                              # (2H, 8H) bf16
    size_col = size_col_ref[...]                                  # (B, 1) int32
    fwd_half = lax.broadcasted_iota(jnp.int32, (1, HH), 1) < H    # (1, 2H) bool

    h = h_sc[...]
    cs = c_sc[...]
    # TODO(synk): if TC is raised well beyond ~32, switch this static unroll to
    #             lax.fori_loop(..., unroll=4) to bound vreg live ranges.
    for i in range(TC):
        t = chunk * TC + i                                        # fwd time index
        tb = (T_pad - 1) - t                                      # bwd time index
        gates = xproj_ref[i].astype(f32) + jnp.dot(
            h.astype(jnp.bfloat16), wh, preferred_element_type=f32)   # (B, 8H)
        # one contiguous sigmoid slab, tanh gate last (fewer/wider EUP issues)
        sg = jax.nn.sigmoid(gates[:, :6 * H])
        g_all = jnp.tanh(gates[:, 6 * H:])
        i_all = sg[:, 0 * HH:1 * HH]
        f_all = sg[:, 1 * HH:2 * HH]
        o_all = sg[:, 2 * HH:3 * HH]
        cs = f_all * cs + i_all * g_all
        h = o_all * jnp.tanh(cs)
        # packed-sequence semantics: hold the BACKWARD half at 0 while tb >= len[b]
        keep = jnp.logical_or(fwd_half, size_col > tb)            # (B, 2H) bool
        h = jnp.where(keep, h, 0.0)
        cs = jnp.where(keep, cs, 0.0)
        # hidden-history slab stores; score projection is hoisted to the epilogue
        hsf_sc[t] = h[:, :H]
        hsb_sc[tb] = h[:, H:]
    h_sc[...] = h
    c_sc[...] = cs

    # ---- epilogue: ONE score projection + batch-axis softmax + rho mixing ----
    @pl.when(chunk == pl.num_programs(0) - 1)
    def _():
        lin = lin_ref[...].astype(f32)                            # (1, 2H)
        w1 = lin[:, :H].reshape(1, 1, H)
        w2 = lin[:, H:].reshape(1, 1, H)
        lg = (jnp.sum(hsf_sc[...] * w1, axis=-1)
              + jnp.sum(hsb_sc[...] * w2, axis=-1))               # (T_pad, B)
        t_ids = lax.broadcasted_iota(jnp.int32, (T_pad, B), 0)
        size_row = size_row_ref[...]                              # (1, B) int32
        lg = jnp.where(t_ids < size_row, lg, -jnp.inf)            # mask_matrix = log(0/1)
        m = jnp.max(lg, axis=1, keepdims=True)                    # softmax over BATCH (torch dim=1)
        m = jnp.maximum(m, -1e30)                                 # guard all-masked time rows
        e = jnp.exp(lg - m)
        denom = jnp.sum(e, axis=1, keepdims=True)
        sm = e / jnp.maximum(denom, 1e-30)
        size_f = jnp.maximum(size_row.astype(f32), 1.0)           # guard padded rows (len 0)
        w = rho * sm + (1.0 - rho) / size_f                       # (T_pad, B)
        w = jnp.where(denom > 0.0, w, 0.0)                        # T_pad > max(size) guard
        w_ref[...] = w


def _pooling_kernel(TC, w_ref, emb_ref, out_ref):
    """Streamed rho-mixed attention pooling: out[b,:] = sum_t w[t,b] * emb[t,b,:]."""
    @pl.when(pl.program_id(0) == 0)
    def _():
        out_ref[...] = jnp.zeros_like(out_ref)
    acc = out_ref[...]
    for i in range(TC):
        acc = acc + w_ref[i] * emb_ref[i].astype(jnp.float32)
    out_ref[...] = acc


def auto_block_encoder_forward(seq, size, params, rho):
    """Pallas implementation of AutoBlockEncoder.forward (seq: [T,B] int32, size: [B])."""
    T, B = seq.shape
    emb_table = params["embedding"]                               # (V, E)
    E = emb_table.shape[1]
    H = params["w_hh_f"].shape[1]
    GG = 8 * H                                                    # fused gate width

    TC = _TIME_CHUNK
    T_pad = ((T + TC - 1) // TC) * TC
    B_pad = ((B + 7) // 8) * 8

    # ---- pad batch (length-0 rows) and time (zero-embedding rows, fully masked) ----
    seq_p = jnp.pad(seq, ((0, 0), (0, B_pad - B)))
    size_p = jnp.pad(size.astype(jnp.int32), (0, B_pad - B))

    emb = emb_table[seq_p].astype(jnp.float32)                    # (T, B_pad, E)
    emb = jnp.pad(emb, ((0, T_pad - T), (0, 0), (0, 0)))          # (T_pad, B_pad, E)
    emb_bf16 = emb.astype(jnp.bfloat16)

    # ---- repack LSTM weights: gate order [i, f, o, g], fwd/bwd interleaved ----
    def gate_cols(w, fan_in):
        wg = w.reshape(4, H, fan_in)                              # torch rows: i, f, g, o
        wg = jnp.stack([wg[0], wg[1], wg[3], wg[2]], axis=0)      # -> i, f, o, g
        return jnp.transpose(wg, (0, 2, 1))                       # (4, fan_in, H)

    def gate_bias(b_ih, b_hh):
        b = (b_ih + b_hh).reshape(4, H)
        return jnp.stack([b[0], b[1], b[3], b[2]], axis=0)        # (4, H)

    wx_f, wx_b = gate_cols(params["w_ih_f"], E), gate_cols(params["w_ih_b"], E)
    wh_f, wh_b = gate_cols(params["w_hh_f"], H), gate_cols(params["w_hh_b"], H)
    b_f = gate_bias(params["b_ih_f"], params["b_hh_f"])
    b_b = gate_bias(params["b_ih_b"], params["b_hh_b"])

    # single fused (E, 8H) input-projection weight, columns [i_f,i_b,f_f,f_b,o_f,o_b,g_f,g_b]
    w_x = jnp.transpose(jnp.stack([wx_f, wx_b], axis=1), (2, 0, 1, 3)).reshape(E, GG)
    bias = jnp.stack([b_f, b_b], axis=1).reshape(1, GG)

    # input projection hoisted out of the recurrence: ONE lane-dense bf16 MXU matmul
    xp = (jnp.dot(emb_bf16.reshape(T_pad * B_pad, E), w_x.astype(jnp.bfloat16),
                  preferred_element_type=jnp.float32)
          + bias).reshape(T_pad, B_pad, 4, 2, H).astype(jnp.bfloat16)
    # bwd gate columns are consumed in reversed time order -> pre-reverse only them
    xproj = jnp.stack([xp[:, :, :, 0, :], xp[::-1, :, :, 1, :]],
                      axis=3).reshape(T_pad, B_pad, GG)

    # block-diagonal recurrent weights (2H, 8H) matching the interleaved column order
    wh = jnp.zeros((2 * H, GG), jnp.float32)
    for k in range(4):
        wh = wh.at[:H, (2 * k) * H:(2 * k + 1) * H].set(wh_f[k])
        wh = wh.at[H:, (2 * k + 1) * H:(2 * k + 2) * H].set(wh_b[k])
    wh = wh.astype(jnp.bfloat16)

    lin_row = params["linear_w"].reshape(1, 2 * H).astype(jnp.float32)
    size_col = size_p.reshape(B_pad, 1)
    size_row = size_p.reshape(1, B_pad)

    n_chunks = T_pad // TC
    arb = ("arbitrary",)

    # ---- pass 1: streamed recurrence -> rho-mixed pooling weights (T_pad, B_pad) ----
    vmem_a = (2 * TC * B_pad * GG * 2 + 2 * T_pad * B_pad * H * 4
              + 2 * T_pad * B_pad * 4 + 2 * B_pad * 2 * H * 4 + 2 * H * GG * 2)
    kernel_a = functools.partial(_recurrence_kernel, float(rho), T_pad, TC, B_pad, H)
    w_tb = pl.pallas_call(
        kernel_a,
        grid=(n_chunks,),
        in_specs=[
            pl.BlockSpec((TC, B_pad, GG), lambda c: (c, 0, 0)),   # xproj (streamed, bf16)
            pl.BlockSpec((B_pad, 1), lambda c: (0, 0)),           # lengths, sublane layout
            pl.BlockSpec((1, B_pad), lambda c: (0, 0)),           # lengths, lane layout
            pl.BlockSpec((2 * H, GG), lambda c: (0, 0)),          # recurrent weights
            pl.BlockSpec((1, 2 * H), lambda c: (0, 0)),           # attention (linear) weights
        ],
        out_specs=pl.BlockSpec((T_pad, B_pad), lambda c: (0, 0)),
        out_shape=jax.ShapeDtypeStruct((T_pad, B_pad), jnp.float32),
        scratch_shapes=[
            pltpu.VMEM((B_pad, 2 * H), jnp.float32),              # h carry
            pltpu.VMEM((B_pad, 2 * H), jnp.float32),              # c carry
            pltpu.VMEM((T_pad, B_pad, H), jnp.float32),           # fwd hidden history
            pltpu.VMEM((T_pad, B_pad, H), jnp.float32),           # bwd hidden history
        ],
        compiler_params=pltpu.CompilerParams(
            dimension_semantics=arb,
            vmem_limit_bytes=int(min(100 << 20, 2 * vmem_a + (4 << 20)))),
    )(xproj, size_col, size_row, wh, lin_row)

    # ---- pass 2: streamed pooling over the embedded sequence ----
    vmem_b = 2 * TC * B_pad * (E * 2 + 4) + 2 * B_pad * E * 4
    out = pl.pallas_call(
        functools.partial(_pooling_kernel, TC),
        grid=(n_chunks,),
        in_specs=[
            pl.BlockSpec((TC, B_pad, 1), lambda c: (c, 0, 0)),    # pooled weights (streamed)
            pl.BlockSpec((TC, B_pad, E), lambda c: (c, 0, 0)),    # embedded sequence (streamed)
        ],
        out_specs=pl.BlockSpec((B_pad, E), lambda c: (0, 0)),
        out_shape=jax.ShapeDtypeStruct((B_pad, E), jnp.float32),
        compiler_params=pltpu.CompilerParams(
            dimension_semantics=arb,
            vmem_limit_bytes=int(min(100 << 20, 2 * vmem_b + (4 << 20)))),
    )(w_tb.reshape(T_pad, B_pad, 1), emb_bf16)
    return out[:B]


def reference_forward(seq, size, params, rho):
    """Independent pure-JAX f32 reference of the torch module (packed bi-LSTM + pooling)."""
    hi = lax.Precision.HIGHEST
    emb_table = params["embedding"]
    emb = emb_table[seq].astype(jnp.float32)                      # (T, B, E)
    T, B, E = emb.shape
    H = params["w_hh_f"].shape[1]

    def run(emb_seq, w_ih, w_hh, b_ih, b_hh):
        def step(carry, x):
            h, c = carry
            gates = (jnp.dot(x, w_ih.T, precision=hi)
                     + jnp.dot(h, w_hh.T, precision=hi) + b_ih + b_hh)
            i, f, g, o = jnp.split(gates, 4, axis=-1)
            i = jax.nn.sigmoid(i)
            f = jax.nn.sigmoid(f)
            g = jnp.tanh(g)
            o = jax.nn.sigmoid(o)
            c = f * c + i * g
            h = o * jnp.tanh(c)
            return (h, c), h
        init = (jnp.zeros((B, H), jnp.float32), jnp.zeros((B, H), jnp.float32))
        _, hs = lax.scan(step, init, emb_seq)
        return hs                                                 # (T, B, H)

    h_fwd = run(emb, params["w_ih_f"], params["w_hh_f"],
                params["b_ih_f"], params["b_hh_f"])

    # packed backward: reverse each sequence individually, run forward, un-reverse.
    rev_idx = jnp.clip(size[None, :] - 1 - jnp.arange(T)[:, None], 0, T - 1)  # (T, B)
    rev_emb = jnp.take_along_axis(emb, rev_idx[:, :, None], axis=0)
    h_rev = run(rev_emb, params["w_ih_b"], params["w_hh_b"],
                params["b_ih_b"], params["b_hh_b"])
    h_bwd = jnp.take_along_axis(h_rev, rev_idx[:, :, None], axis=0)

    lin = params["linear_w"]
    logits = (jnp.dot(h_fwd, lin[0, :H], precision=hi)
              + jnp.dot(h_bwd, lin[0, H:], precision=hi))         # (T, B)
    valid = jnp.arange(T)[:, None] < size[None, :]
    logits = jnp.where(valid, logits, -jnp.inf)
    sm = jax.nn.softmax(logits, axis=1)                           # torch dim=1 (batch)
    w = rho * sm + (1 - rho) / size[None, :].astype(jnp.float32)
    return jnp.sum(w[:, :, None] * emb, axis=0)                   # (B, E)


if __name__ == "__main__":
    key = jax.random.PRNGKey(0)
    ks = jax.random.split(key, 12)

    V, E, H = 50, 32, 16        # vocab, embedding dim, LSTM hidden size (8H = 128 lanes)
    T, B = 8, 3                 # max sequence length (== size.max()), batch
    rho = 0.75

    def u(k, shape, scale=0.4):
        return (jax.random.uniform(k, shape, dtype=jnp.float32) - 0.5) * scale

    params = {
        "embedding": jax.random.normal(ks[0], (V, E), jnp.float32) * 0.5,
        "w_ih_f": u(ks[1], (4 * H, E)),
        "w_hh_f": u(ks[2], (4 * H, H)),
        "b_ih_f": u(ks[3], (4 * H,)),
        "b_hh_f": u(ks[4], (4 * H,)),
        "w_ih_b": u(ks[5], (4 * H, E)),
        "w_hh_b": u(ks[6], (4 * H, H)),
        "b_ih_b": u(ks[7], (4 * H,)),
        "b_hh_b": u(ks[8], (4 * H,)),
        "linear_w": u(ks[9], (1, 2 * H)),
    }

    size = jnp.array([5, 8, 3], dtype=jnp.int32)      # unsorted lengths, max == T
    seq = jax.random.randint(ks[10], (T, B), 0, V, dtype=jnp.int32)
    valid_tb = jnp.arange(T)[:, None] < size[None, :]
    seq = jnp.where(valid_tb, seq, 0)                 # pad token = 0

    out = jax.block_until_ready(auto_block_encoder_forward(seq, size, params, rho))
    ref = jax.block_until_ready(reference_forward(seq, size, params, rho))

    assert out.shape == (B, E)
    # kernel uses bf16 MXU operands / bf16 streamed activations -> bf16-level tolerance
    if not np.allclose(np.asarray(out), np.asarray(ref), rtol=2e-2, atol=2e-2):
        err = float(np.max(np.abs(np.asarray(out) - np.asarray(ref))))
        raise AssertionError(f"Pallas kernel does not match reference (max abs err {err})")
    print("KERNEL_OK")
</pallas_src>

<mosaic_0001>
module attributes {stable_mosaic.version = 11 : i64} {
  func.func @_recurrence_kernel(%arg0: i32, %arg1: memref<8x8x128xbf16, #tpu.memory_space<vmem>>, %arg2: memref<8x1xi32, #tpu.memory_space<vmem>>, %arg3: memref<1x8xi32, #tpu.memory_space<vmem>>, %arg4: memref<32x128xbf16, #tpu.memory_space<vmem>>, %arg5: memref<1x32xf32, #tpu.memory_space<vmem>>, %arg6: memref<8x8xf32, #tpu.memory_space<vmem>>, %arg7: memref<8x32xf32, #tpu.memory_space<vmem>>, %arg8: memref<8x32xf32, #tpu.memory_space<vmem>>, %arg9: memref<8x8x16xf32, #tpu.memory_space<vmem>>, %arg10: memref<8x8x16xf32, #tpu.memory_space<vmem>>) attributes {dimension_semantics = [#tpu.dimension_semantics<arbitrary>], iteration_bounds = array<i64: 1>, scalar_prefetch = 0 : i64, scratch_operands = 4 : i64, tpu.core_type = #tpu.core_type<tc>, window_params = [{transform_indices = @transform_0, window_bounds = array<i64: 8, 8, 128>}, {pipeline_mode = #tpu.pipeline_mode<synchronous>, transform_indices = @transform_1, window_bounds = array<i64: 8, 1>}, {pipeline_mode = #tpu.pipeline_mode<synchronous>, transform_indices = @transform_2, window_bounds = array<i64: 1, 8>}, {pipeline_mode = #tpu.pipeline_mode<synchronous>, transform_indices = @transform_3, window_bounds = array<i64: 32, 128>}, {pipeline_mode = #tpu.pipeline_mode<synchronous>, transform_indices = @transform_4, window_bounds = array<i64: 1, 32>}, {pipeline_mode = #tpu.pipeline_mode<synchronous>, transform_indices = @transform_5, window_bounds = array<i64: 8, 8>}]} {
    %c0_i32 = arith.constant 0 : i32
    %0 = arith.cmpi eq, %arg0, %c0_i32 : i32
    %1 = arith.extui %0 : i1 to i32
    %c0_i32_0 = arith.constant 0 : i32
    %2 = arith.cmpi ne, %1, %c0_i32_0 : i32
    scf.if %2 {
      %cst_110 = arith.constant 0.000000e+00 : f32
      %367 = vector.broadcast %cst_110 : f32 to vector<8x32xf32>
      %c0_111 = arith.constant 0 : index
      %c0_112 = arith.constant 0 : index
      %368 = vector.load %arg7[%c0_111, %c0_112] : memref<8x32xf32, #tpu.memory_space<vmem>>, vector<8x32xf32>
      tpu.vector_store %arg7[%c0_111, %c0_112], %367 {strides = array<i32>} : memref<8x32xf32, #tpu.memory_space<vmem>>, vector<8x32xf32>,
      %cst_113 = arith.constant 0.000000e+00 : f32
      %369 = vector.broadcast %cst_113 : f32 to vector<8x32xf32>
      %c0_114 = arith.constant 0 : index
      %c0_115 = arith.constant 0 : index
      %370 = vector.load %arg8[%c0_114, %c0_115] : memref<8x32xf32, #tpu.memory_space<vmem>>, vector<8x32xf32>
      tpu.vector_store %arg8[%c0_114, %c0_115], %369 {strides = array<i32>} : memref<8x32xf32, #tpu.memory_space<vmem>>, vector<8x32xf32>,
    } else {
    }
    %c0 = arith.constant 0 : index
    %c0_1 = arith.constant 0 : index
    %3 = vector.load %arg4[%c0, %c0_1] : memref<32x128xbf16, #tpu.memory_space<vmem>>, vector<32x128xbf16>
    %c0_2 = arith.constant 0 : index
    %c0_3 = arith.constant 0 : index
    %4 = vector.load %arg2[%c0_2, %c0_3] : memref<8x1xi32, #tpu.memory_space<vmem>>, vector<8x1xi32>
    %5 = tpu.iota {dimensions = array<i32: 1>} : vector<1x32xi32>
    %c16_i32 = arith.constant 16 : i32
    %6 = vector.broadcast %c16_i32 : i32 to vector<1x32xi32>
    %7 = arith.cmpi slt, %5, %6 : vector<1x32xi32>
    %c0_4 = arith.constant 0 : index
    %c0_5 = arith.constant 0 : index
    %8 = vector.load %arg7[%c0_4, %c0_5] : memref<8x32xf32, #tpu.memory_space<vmem>>, vector<8x32xf32>
    %c0_6 = arith.constant 0 : index
    %c0_7 = arith.constant 0 : index
    %9 = vector.load %arg8[%c0_6, %c0_7] : memref<8x32xf32, #tpu.memory_space<vmem>>, vector<8x32xf32>
    %c8_i32 = arith.constant 8 : i32
    %10 = arith.muli %arg0, %c8_i32 : i32
    %c0_i32_8 = arith.constant 0 : i32
    %11 = arith.addi %10, %c0_i32_8 : i32
    %c7_i32 = arith.constant 7 : i32
    %12 = arith.subi %c7_i32, %11 : i32
    %c0_9 = arith.constant 0 : index
    %c0_10 = arith.constant 0 : index
    %c0_11 = arith.constant 0 : index
    %13 = vector.load %arg1[%c0_9, %c0_10, %c0_11] : memref<8x8x128xbf16, #tpu.memory_space<vmem>>, vector<1x8x128xbf16>
    %14 = vector.shape_cast %13 : vector<1x8x128xbf16> to vector<8x128xbf16>
    %15 = arith.extf %14 : vector<8x128xbf16> to vector<8x128xf32>
    %16 = arith.truncf %8 : vector<8x32xf32> to vector<8x32xbf16>
    %cst = arith.constant dense<0.000000e+00> : vector<8x128xf32>
    %17 = tpu.matmul %16, %3, %cst {dimension_numbers = #tpu.dot_dimension_numbers<[1], [0], [0], [1], [0, 0, 1, 1], [], []>} : vector<8x32xbf16>, vector<32x128xbf16>, vector<8x128xf32> -> vector<8x128xf32>
    %18 = arith.addf %15, %17 : vector<8x128xf32>
    %19 = vector.extract_strided_slice %18 {offsets = [0, 0], sizes = [8, 96], strides = [1, 1]} : vector<8x128xf32> to vector<8x96xf32>
    %20 = arith.negf %19 : vector<8x96xf32>
    %21 = math.exp %20 : vector<8x96xf32>
    %cst_12 = arith.constant 1.000000e+00 : f32
    %22 = vector.broadcast %cst_12 : f32 to vector<8x96xf32>
    %23 = arith.addf %22, %21 : vector<8x96xf32>
    %24 = arith.divf %22, %23 : vector<8x96xf32>
    %25 = vector.extract_strided_slice %18 {offsets = [0, 96], sizes = [8, 32], strides = [1, 1]} : vector<8x128xf32> to vector<8x32xf32>
    %26 = math.tanh %25 : vector<8x32xf32>
    %27 = vector.extract_strided_slice %24 {offsets = [0, 0], sizes = [8, 32], strides = [1, 1]} : vector<8x96xf32> to vector<8x32xf32>
    %28 = vector.extract_strided_slice %24 {offsets = [0, 32], sizes = [8, 32], strides = [1, 1]} : vector<8x96xf32> to vector<8x32xf32>
    %29 = vector.extract_strided_slice %24 {offsets = [0, 64], sizes = [8, 32], strides = [1, 1]} : vector<8x96xf32> to vector<8x32xf32>
    %30 = arith.mulf %28, %9 : vector<8x32xf32>
    %31 = arith.mulf %27, %26 : vector<8x32xf32>
    %32 = arith.addf %30, %31 : vector<8x32xf32>
    %33 = math.tanh %32 : vector<8x32xf32>
    %34 = arith.mulf %29, %33 : vector<8x32xf32>
    %35 = vector.broadcast %12 : i32 to vector<8x1xi32>
    %36 = arith.cmpi sgt, %4, %35 : vector<8x1xi32>
    %37 = vector.broadcast %7 : vector<1x32xi1> to vector<8x32xi1>
    %38 = vector.broadcast %36 : vector<8x1xi1> to vector<8x32xi1>
    %39 = arith.ori %37, %38 : vector<8x32xi1>
    %cst_13 = arith.constant 0.000000e+00 : f32
    %40 = vector.broadcast %cst_13 : f32 to vector<8x32xf32>
    %41 = arith.select %39, %34, %40 : vector<8x32xi1>, vector<8x32xf32>
    %cst_14 = arith.constant 0.000000e+00 : f32
    %42 = vector.broadcast %cst_14 : f32 to vector<8x32xf32>
    %43 = arith.select %39, %32, %42 : vector<8x32xi1>, vector<8x32xf32>
    %44 = vector.extract_strided_slice %41 {offsets = [0, 0], sizes = [8, 16], strides = [1, 1]} : vector<8x32xf32> to vector<8x16xf32>
    %45 = arith.index_cast %11 : i32 to index
    %c0_15 = arith.constant 0 : index
    %c0_16 = arith.constant 0 : index
    %46 = vector.load %arg9[%45, %c0_15, %c0_16] : memref<8x8x16xf32, #tpu.memory_space<vmem>>, vector<1x8x16xf32>
    %47 = vector.shape_cast %46 : vector<1x8x16xf32> to vector<8x16xf32>
    %48 = vector.shape_cast %44 : vector<8x16xf32> to vector<1x8x16xf32>
    tpu.vector_store %arg9[%45, %c0_15, %c0_16], %48 {strides = array<i32>} : memref<8x8x16xf32, #tpu.memory_space<vmem>>, vector<1x8x16xf32>,
    %49 = vector.extract_strided_slice %41 {offsets = [0, 16], sizes = [8, 16], strides = [1, 1]} : vector<8x32xf32> to vector<8x16xf32>
    %50 = arith.index_cast %12 : i32 to index
    %c0_17 = arith.constant 0 : index
    %c0_18 = arith.constant 0 : index
    %51 = vector.load %arg10[%50, %c0_17, %c0_18] : memref<8x8x16xf32, #tpu.memory_space<vmem>>, vector<1x8x16xf32>
    %52 = vector.shape_cast %51 : vector<1x8x16xf32> to vector<8x16xf32>
    %53 = vector.shape_cast %49 : vector<8x16xf32> to vector<1x8x16xf32>
    tpu.vector_store %arg10[%50, %c0_17, %c0_18], %53 {strides = array<i32>} : memref<8x8x16xf32, #tpu.memory_space<vmem>>, vector<1x8x16xf32>,
    %c8_i32_19 = arith.constant 8 : i32
    %54 = arith.muli %arg0, %c8_i32_19 : i32
    %c1_i32 = arith.constant 1 : i32
    %55 = arith.addi %54, %c1_i32 : i32
    %c7_i32_20 = arith.constant 7 : i32
    %56 = arith.subi %c7_i32_20, %55 : i32
    %c1 = arith.constant 1 : index
    %c0_21 = arith.constant 0 : index
    %c0_22 = arith.constant 0 : index
    %57 = vector.load %arg1[%c1, %c0_21, %c0_22] : memref<8x8x128xbf16, #tpu.memory_space<vmem>>, vector<1x8x128xbf16>
    %58 = vector.shape_cast %57 : vector<1x8x128xbf16> to vector<8x128xbf16>
    %59 = arith.extf %58 : vector<8x128xbf16> to vector<8x128xf32>
    %60 = arith.truncf %41 : vector<8x32xf32> to vector<8x32xbf16>
    %cst_23 = arith.constant dense<0.000000e+00> : vector<8x128xf32>
    %61 = tpu.matmul %60, %3, %cst_23 {dimension_numbers = #tpu.dot_dimension_numbers<[1], [0], [0], [1], [0, 0, 1, 1], [], []>} : vector<8x32xbf16>, vector<32x128xbf16>, vector<8x128xf32> -> vector<8x128xf32>
    %62 = arith.addf %59, %61 : vector<8x128xf32>
    %63 = vector.extract_strided_slice %62 {offsets = [0, 0], sizes = [8, 96], strides = [1, 1]} : vector<8x128xf32> to vector<8x96xf32>
    %64 = arith.negf %63 : vector<8x96xf32>
    %65 = math.exp %64 : vector<8x96xf32>
    %cst_24 = arith.constant 1.000000e+00 : f32
    %66 = vector.broadcast %cst_24 : f32 to vector<8x96xf32>
    %67 = arith.addf %66, %65 : vector<8x96xf32>
    %68 = arith.divf %66, %67 : vector<8x96xf32>
    %69 = vector.extract_strided_slice %62 {offsets = [0, 96], sizes = [8, 32], strides = [1, 1]} : vector<8x128xf32> to vector<8x32xf32>
    %70 = math.tanh %69 : vector<8x32xf32>
    %71 = vector.extract_strided_slice %68 {offsets = [0, 0], sizes = [8, 32], strides = [1, 1]} : vector<8x96xf32> to vector<8x32xf32>
    %72 = vector.extract_strided_slice %68 {offsets = [0, 32], sizes = [8, 32], strides = [1, 1]} : vector<8x96xf32> to vector<8x32xf32>
    %73 = vector.extract_strided_slice %68 {offsets = [0, 64], sizes = [8, 32], strides = [1, 1]} : vector<8x96xf32> to vector<8x32xf32>
    %74 = arith.mulf %72, %43 : vector<8x32xf32>
    %75 = arith.mulf %71, %70 : vector<8x32xf32>
    %76 = arith.addf %74, %75 : vector<8x32xf32>
    %77 = math.tanh %76 : vector<8x32xf32>
    %78 = arith.mulf %73, %77 : vector<8x32xf32>
    %79 = vector.broadcast %56 : i32 to vector<8x1xi32>
    %80 = arith.cmpi sgt, %4, %79 : vector<8x1xi32>
    %81 = vector.broadcast %7 : vector<1x32xi1> to vector<8x32xi1>
    %82 = vector.broadcast %80 : vector<8x1xi1> to vector<8x32xi1>
    %83 = arith.ori %81, %82 : vector<8x32xi1>
    %cst_25 = arith.constant 0.000000e+00 : f32
    %84 = vector.broadcast %cst_25 : f32 to vector<8x32xf32>
    %85 = arith.select %83, %78, %84 : vector<8x32xi1>, vector<8x32xf32>
    %cst_26 = arith.constant 0.000000e+00 : f32
    %86 = vector.broadcast %cst_26 : f32 to vector<8x32xf32>
    %87 = arith.select %83, %76, %86 : vector<8x32xi1>, vector<8x32xf32>
    %88 = vector.extract_strided_slice %85 {offsets = [0, 0], sizes = [8, 16], strides = [1, 1]} : vector<8x32xf32> to vector<8x16xf32>
    %89 = arith.index_cast %55 : i32 to index
    %c0_27 = arith.constant 0 : index
    %c0_28 = arith.constant 0 : index
    %90 = vector.load %arg9[%89, %c0_27, %c0_28] : memref<8x8x16xf32, #tpu.memory_space<vmem>>, vector<1x8x16xf32>
    %91 = vector.shape_cast %90 : vector<1x8x16xf32> to vector<8x16xf32>
    %92 = vector.shape_cast %88 : vector<8x16xf32> to vector<1x8x16xf32>
    tpu.vector_store %arg9[%89, %c0_27, %c0_28], %92 {strides = array<i32>} : memref<8x8x16xf32, #tpu.memory_space<vmem>>, vector<1x8x16xf32>,
    %93 = vector.extract_strided_slice %85 {offsets = [0, 16], sizes = [8, 16], strides = [1, 1]} : vector<8x32xf32> to vector<8x16xf32>
    %94 = arith.index_cast %56 : i32 to index
    %c0_29 = arith.constant 0 : index
    %c0_30 = arith.constant 0 : index
    %95 = vector.load %arg10[%94, %c0_29, %c0_30] : memref<8x8x16xf32, #tpu.memory_space<vmem>>, vector<1x8x16xf32>
    %96 = vector.shape_cast %95 : vector<1x8x16xf32> to vector<8x16xf32>
    %97 = vector.shape_cast %93 : vector<8x16xf32> to vector<1x8x16xf32>
    tpu.vector_store %arg10[%94, %c0_29, %c0_30], %97 {strides = array<i32>} : memref<8x8x16xf32, #tpu.memory_space<vmem>>, vector<1x8x16xf32>,
    %c8_i32_31 = arith.constant 8 : i32
    %98 = arith.muli %arg0, %c8_i32_31 : i32
    %c2_i32 = arith.constant 2 : i32
    %99 = arith.addi %98, %c2_i32 : i32
    %c7_i32_32 = arith.constant 7 : i32
    %100 = arith.subi %c7_i32_32, %99 : i32
    %c2 = arith.constant 2 : index
    %c0_33 = arith.constant 0 : index
    %c0_34 = arith.constant 0 : index
    %101 = vector.load %arg1[%c2, %c0_33, %c0_34] : memref<8x8x128xbf16, #tpu.memory_space<vmem>>, vector<1x8x128xbf16>
    %102 = vector.shape_cast %101 : vector<1x8x128xbf16> to vector<8x128xbf16>
    %103 = arith.extf %102 : vector<8x128xbf16> to vector<8x128xf32>
    %104 = arith.truncf %85 : vector<8x32xf32> to vector<8x32xbf16>
    %cst_35 = arith.constant dense<0.000000e+00> : vector<8x128xf32>
    %105 = tpu.matmul %104, %3, %cst_35 {dimension_numbers = #tpu.dot_dimension_numbers<[1], [0], [0], [1], [0, 0, 1, 1], [], []>} : vector<8x32xbf16>, vector<32x128xbf16>, vector<8x128xf32> -> vector<8x128xf32>
    %106 = arith.addf %103, %105 : vector<8x128xf32>
    %107 = vector.extract_strided_slice %106 {offsets = [0, 0], sizes = [8, 96], strides = [1, 1]} : vector<8x128xf32> to vector<8x96xf32>
    %108 = arith.negf %107 : vector<8x96xf32>
    %109 = math.exp %108 : vector<8x96xf32>
    %cst_36 = arith.constant 1.000000e+00 : f32
    %110 = vector.broadcast %cst_36 : f32 to vector<8x96xf32>
    %111 = arith.addf %110, %109 : vector<8x96xf32>
    %112 = arith.divf %110, %111 : vector<8x96xf32>
    %113 = vector.extract_strided_slice %106 {offsets = [0, 96], sizes = [8, 32], strides = [1, 1]} : vector<8x128xf32> to vector<8x32xf32>
    %114 = math.tanh %113 : vector<8x32xf32>
    %115 = vector.extract_strided_slice %112 {offsets = [0, 0], sizes = [8, 32], strides = [1, 1]} : vector<8x96xf32> to vector<8x32xf32>
    %116 = vector.extract_strided_slice %112 {offsets = [0, 32], sizes = [8, 32], strides = [1, 1]} : vector<8x96xf32> to vector<8x32xf32>
    %117 = vector.extract_strided_slice %112 {offsets = [0, 64], sizes = [8, 32], strides = [1, 1]} : vector<8x96xf32> to vector<8x32xf32>
    %118 = arith.mulf %116, %87 : vector<8x32xf32>
    %119 = arith.mulf %115, %114 : vector<8x32xf32>
    %120 = arith.addf %118, %119 : vector<8x32xf32>
    %121 = math.tanh %120 : vector<8x32xf32>
    %122 = arith.mulf %117, %121 : vector<8x32xf32>
    %123 = vector.broadcast %100 : i32 to vector<8x1xi32>
    %124 = arith.cmpi sgt, %4, %123 : vector<8x1xi32>
    %125 = vector.broadcast %7 : vector<1x32xi1> to vector<8x32xi1>
    %126 = vector.broadcast %124 : vector<8x1xi1> to vector<8x32xi1>
    %127 = arith.ori %125, %126 : vector<8x32xi1>
    %cst_37 = arith.constant 0.000000e+00 : f32
    %128 = vector.broadcast %cst_37 : f32 to vector<8x32xf32>
    %129 = arith.select %127, %122, %128 : vector<8x32xi1>, vector<8x32xf32>
    %cst_38 = arith.constant 0.000000e+00 : f32
    %130 = vector.broadcast %cst_38 : f32 to vector<8x32xf32>
    %131 = arith.select %127, %120, %130 : vector<8x32xi1>, vector<8x32xf32>
    %132 = vector.extract_strided_slice %129 {offsets = [0, 0], sizes = [8, 16], strides = [1, 1]} : vector<8x32xf32> to vector<8x16xf32>
    %133 = arith.index_cast %99 : i32 to index
    %c0_39 = arith.constant 0 : index
    %c0_40 = arith.constant 0 : index
    %134 = vector.load %arg9[%133, %c0_39, %c0_40] : memref<8x8x16xf32, #tpu.memory_space<vmem>>, vector<1x8x16xf32>
    %135 = vector.shape_cast %134 : vector<1x8x16xf32> to vector<8x16xf32>
    %136 = vector.shape_cast %132 : vector<8x16xf32> to vector<1x8x16xf32>
    tpu.vector_store %arg9[%133, %c0_39, %c0_40], %136 {strides = array<i32>} : memref<8x8x16xf32, #tpu.memory_space<vmem>>, vector<1x8x16xf32>,
    %137 = vector.extract_strided_slice %129 {offsets = [0, 16], sizes = [8, 16], strides = [1, 1]} : vector<8x32xf32> to vector<8x16xf32>
    %138 = arith.index_cast %100 : i32 to index
    %c0_41 = arith.constant 0 : index
    %c0_42 = arith.constant 0 : index
    %139 = vector.load %arg10[%138, %c0_41, %c0_42] : memref<8x8x16xf32, #tpu.memory_space<vmem>>, vector<1x8x16xf32>
    %140 = vector.shape_cast %139 : vector<1x8x16xf32> to vector<8x16xf32>
    %141 = vector.shape_cast %137 : vector<8x16xf32> to vector<1x8x16xf32>
    tpu.vector_store %arg10[%138, %c0_41, %c0_42], %141 {strides = array<i32>} : memref<8x8x16xf32, #tpu.memory_space<vmem>>, vector<1x8x16xf32>,
    %c8_i32_43 = arith.constant 8 : i32
    %142 = arith.muli %arg0, %c8_i32_43 : i32
    %c3_i32 = arith.constant 3 : i32
    %143 = arith.addi %142, %c3_i32 : i32
    %c7_i32_44 = arith.constant 7 : i32
    %144 = arith.subi %c7_i32_44, %143 : i32
    %c3 = arith.constant 3 : index
    %c0_45 = arith.constant 0 : index
    %c0_46 = arith.constant 0 : index
    %145 = vector.load %arg1[%c3, %c0_45, %c0_46] : memref<8x8x128xbf16, #tpu.memory_space<vmem>>, vector<1x8x128xbf16>
    %146 = vector.shape_cast %145 : vector<1x8x128xbf16> to vector<8x128xbf16>
    %147 = arith.extf %146 : vector<8x128xbf16> to vector<8x128xf32>
    %148 = arith.truncf %129 : vector<8x32xf32> to vector<8x32xbf16>
    %cst_47 = arith.constant dense<0.000000e+00> : vector<8x128xf32>
    %149 = tpu.matmul %148, %3, %cst_47 {dimension_numbers = #tpu.dot_dimension_numbers<[1], [0], [0], [1], [0, 0, 1, 1], [], []>} : vector<8x32xbf16>, vector<32x128xbf16>, vector<8x128xf32> -> vector<8x128xf32>
    %150 = arith.addf %147, %149 : vector<8x128xf32>
    %151 = vector.extract_strided_slice %150 {offsets = [0, 0], sizes = [8, 96], strides = [1, 1]} : vector<8x128xf32> to vector<8x96xf32>
    %152 = arith.negf %151 : vector<8x96xf32>
    %153 = math.exp %152 : vector<8x96xf32>
    %cst_48 = arith.constant 1.000000e+00 : f32
    %154 = vector.broadcast %cst_48 : f32 to vector<8x96xf32>
    %155 = arith.addf %154, %153 : vector<8x96xf32>
    %156 = arith.divf %154, %155 : vector<8x96xf32>
    %157 = vector.extract_strided_slice %150 {offsets = [0, 96], sizes = [8, 32], strides = [1, 1]} : vector<8x128xf32> to vector<8x32xf32>
    %158 = math.tanh %157 : vector<8x32xf32>
    %159 = vector.extract_strided_slice %156 {offsets = [0, 0], sizes = [8, 32], strides = [1, 1]} : vector<8x96xf32> to vector<8x32xf32>
    %160 = vector.extract_strided_slice %156 {offsets = [0, 32], sizes = [8, 32], strides = [1, 1]} : vector<8x96xf32> to vector<8x32xf32>
    %161 = vector.extract_strided_slice %156 {offsets = [0, 64], sizes = [8, 32], strides = [1, 1]} : vector<8x96xf32> to vector<8x32xf32>
    %162 = arith.mulf %160, %131 : vector<8x32xf32>
    %163 = arith.mulf %159, %158 : vector<8x32xf32>
    %164 = arith.addf %162, %163 : vector<8x32xf32>
    %165 = math.tanh %164 : vector<8x32xf32>
    %166 = arith.mulf %161, %165 : vector<8x32xf32>
    %167 = vector.broadcast %144 : i32 to vector<8x1xi32>
    %168 = arith.cmpi sgt, %4, %167 : vector<8x1xi32>
    %169 = vector.broadcast %7 : vector<1x32xi1> to vector<8x32xi1>
    %170 = vector.broadcast %168 : vector<8x1xi1> to vector<8x32xi1>
    %171 = arith.ori %169, %170 : vector<8x32xi1>
    %cst_49 = arith.constant 0.000000e+00 : f32
    %172 = vector.broadcast %cst_49 : f32 to vector<8x32xf32>
    %173 = arith.select %171, %166, %172 : vector<8x32xi1>, vector<8x32xf32>
    %cst_50 = arith.constant 0.000000e+00 : f32
    %174 = vector.broadcast %cst_50 : f32 to vector<8x32xf32>
    %175 = arith.select %171, %164, %174 : vector<8x32xi1>, vector<8x32xf32>
    %176 = vector.extract_strided_slice %173 {offsets = [0, 0], sizes = [8, 16], strides = [1, 1]} : vector<8x32xf32> to vector<8x16xf32>
    %177 = arith.index_cast %143 : i32 to index
    %c0_51 = arith.constant 0 : index
    %c0_52 = arith.constant 0 : index
    %178 = vector.load %arg9[%177, %c0_51, %c0_52] : memref<8x8x16xf32, #tpu.memory_space<vmem>>, vector<1x8x16xf32>
    %179 = vector.shape_cast %178 : vector<1x8x16xf32> to vector<8x16xf32>
    %180 = vector.shape_cast %176 : vector<8x16xf32> to vector<1x8x16xf32>
    tpu.vector_store %arg9[%177, %c0_51, %c0_52], %180 {strides = array<i32>} : memref<8x8x16xf32, #tpu.memory_space<vmem>>, vector<1x8x16xf32>,
    %181 = vector.extract_strided_slice %173 {offsets = [0, 16], sizes = [8, 16], strides = [1, 1]} : vector<8x32xf32> to vector<8x16xf32>
    %182 = arith.index_cast %144 : i32 to index
    %c0_53 = arith.constant 0 : index
    %c0_54 = arith.constant 0 : index
    %183 = vector.load %arg10[%182, %c0_53, %c0_54] : memref<8x8x16xf32, #tpu.memory_space<vmem>>, vector<1x8x16xf32>
    %184 = vector.shape_cast %183 : vector<1x8x16xf32> to vector<8x16xf32>
    %185 = vector.shape_cast %181 : vector<8x16xf32> to vector<1x8x16xf32>
    tpu.vector_store %arg10[%182, %c0_53, %c0_54], %185 {strides = array<i32>} : memref<8x8x16xf32, #tpu.memory_space<vmem>>, vector<1x8x16xf32>,
    %c8_i32_55 = arith.constant 8 : i32
    %186 = arith.muli %arg0, %c8_i32_55 : i32
    %c4_i32 = arith.constant 4 : i32
    %187 = arith.addi %186, %c4_i32 : i32
    %c7_i32_56 = arith.constant 7 : i32
    %188 = arith.subi %c7_i32_56, %187 : i32
    %c4 = arith.constant 4 : index
    %c0_57 = arith.constant 0 : index
    %c0_58 = arith.constant 0 : index
    %189 = vector.load %arg1[%c4, %c0_57, %c0_58] : memref<8x8x128xbf16, #tpu.memory_space<vmem>>, vector<1x8x128xbf16>
    %190 = vector.shape_cast %189 : vector<1x8x128xbf16> to vector<8x128xbf16>
    %191 = arith.extf %190 : vector<8x128xbf16> to vector<8x128xf32>
    %192 = arith.truncf %173 : vector<8x32xf32> to vector<8x32xbf16>
    %cst_59 = arith.constant dense<0.000000e+00> : vector<8x128xf32>
    %193 = tpu.matmul %192, %3, %cst_59 {dimension_numbers = #tpu.dot_dimension_numbers<[1], [0], [0], [1], [0, 0, 1, 1], [], []>} : vector<8x32xbf16>, vector<32x128xbf16>, vector<8x128xf32> -> vector<8x128xf32>
    %194 = arith.addf %191, %193 : vector<8x128xf32>
    %195 = vector.extract_strided_slice %194 {offsets = [0, 0], sizes = [8, 96], strides = [1, 1]} : vector<8x128xf32> to vector<8x96xf32>
    %196 = arith.negf %195 : vector<8x96xf32>
    %197 = math.exp %196 : vector<8x96xf32>
    %cst_60 = arith.constant 1.000000e+00 : f32
    %198 = vector.broadcast %cst_60 : f32 to vector<8x96xf32>
    %199 = arith.addf %198, %197 : vector<8x96xf32>
    %200 = arith.divf %198, %199 : vector<8x96xf32>
    %201 = vector.extract_strided_slice %194 {offsets = [0, 96], sizes = [8, 32], strides = [1, 1]} : vector<8x128xf32> to vector<8x32xf32>
    %202 = math.tanh %201 : vector<8x32xf32>
    %203 = vector.extract_strided_slice %200 {offsets = [0, 0], sizes = [8, 32], strides = [1, 1]} : vector<8x96xf32> to vector<8x32xf32>
    %204 = vector.extract_strided_slice %200 {offsets = [0, 32], sizes = [8, 32], strides = [1, 1]} : vector<8x96xf32> to vector<8x32xf32>
    %205 = vector.extract_strided_slice %200 {offsets = [0, 64], sizes = [8, 32], strides = [1, 1]} : vector<8x96xf32> to vector<8x32xf32>
    %206 = arith.mulf %204, %175 : vector<8x32xf32>
    %207 = arith.mulf %203, %202 : vector<8x32xf32>
    %208 = arith.addf %206, %207 : vector<8x32xf32>
    %209 = math.tanh %208 : vector<8x32xf32>
    %210 = arith.mulf %205, %209 : vector<8x32xf32>
    %211 = vector.broadcast %188 : i32 to vector<8x1xi32>
    %212 = arith.cmpi sgt, %4, %211 : vector<8x1xi32>
    %213 = vector.broadcast %7 : vector<1x32xi1> to vector<8x32xi1>
    %214 = vector.broadcast %212 : vector<8x1xi1> to vector<8x32xi1>
    %215 = arith.ori %213, %214 : vector<8x32xi1>
    %cst_61 = arith.constant 0.000000e+00 : f32
    %216 = vector.broadcast %cst_61 : f32 to vector<8x32xf32>
    %217 = arith.select %215, %210, %216 : vector<8x32xi1>, vector<8x32xf32>
    %cst_62 = arith.constant 0.000000e+00 : f32
    %218 = vector.broadcast %cst_62 : f32 to vector<8x32xf32>
    %219 = arith.select %215, %208, %218 : vector<8x32xi1>, vector<8x32xf32>
    %220 = vector.extract_strided_slice %217 {offsets = [0, 0], sizes = [8, 16], strides = [1, 1]} : vector<8x32xf32> to vector<8x16xf32>
    %221 = arith.index_cast %187 : i32 to index
    %c0_63 = arith.constant 0 : index
    %c0_64 = arith.constant 0 : index
    %222 = vector.load %arg9[%221, %c0_63, %c0_64] : memref<8x8x16xf32, #tpu.memory_space<vmem>>, vector<1x8x16xf32>
    %223 = vector.shape_cast %222 : vector<1x8x16xf32> to vector<8x16xf32>
    %224 = vector.shape_cast %220 : vector<8x16xf32> to vector<1x8x16xf32>
    tpu.vector_store %arg9[%221, %c0_63, %c0_64], %224 {strides = array<i32>} : memref<8x8x16xf32, #tpu.memory_space<vmem>>, vector<1x8x16xf32>,
    %225 = vector.extract_strided_slice %217 {offsets = [0, 16], sizes = [8, 16], strides = [1, 1]} : vector<8x32xf32> to vector<8x16xf32>
    %226 = arith.index_cast %188 : i32 to index
    %c0_65 = arith.constant 0 : index
    %c0_66 = arith.constant 0 : index
    %227 = vector.load %arg10[%226, %c0_65, %c0_66] : memref<8x8x16xf32, #tpu.memory_space<vmem>>, vector<1x8x16xf32>
    %228 = vector.shape_cast %227 : vector<1x8x16xf32> to vector<8x16xf32>
    %229 = vector.shape_cast %225 : vector<8x16xf32> to vector<1x8x16xf32>
    tpu.vector_store %arg10[%226, %c0_65, %c0_66], %229 {strides = array<i32>} : memref<8x8x16xf32, #tpu.memory_space<vmem>>, vector<1x8x16xf32>,
    %c8_i32_67 = arith.constant 8 : i32
    %230 = arith.muli %arg0, %c8_i32_67 : i32
    %c5_i32 = arith.constant 5 : i32
    %231 = arith.addi %230, %c5_i32 : i32
    %c7_i32_68 = arith.constant 7 : i32
    %232 = arith.subi %c7_i32_68, %231 : i32
    %c5 = arith.constant 5 : index
    %c0_69 = arith.constant 0 : index
    %c0_70 = arith.constant 0 : index
    %233 = vector.load %arg1[%c5, %c0_69, %c0_70] : memref<8x8x128xbf16, #tpu.memory_space<vmem>>, vector<1x8x128xbf16>
    %234 = vector.shape_cast %233 : vector<1x8x128xbf16> to vector<8x128xbf16>
    %235 = arith.extf %234 : vector<8x128xbf16> to vector<8x128xf32>
    %236 = arith.truncf %217 : vector<8x32xf32> to vector<8x32xbf16>
    %cst_71 = arith.constant dense<0.000000e+00> : vector<8x128xf32>
    %237 = tpu.matmul %236, %3, %cst_71 {dimension_numbers = #tpu.dot_dimension_numbers<[1], [0], [0], [1], [0, 0, 1, 1], [], []>} : vector<8x32xbf16>, vector<32x128xbf16>, vector<8x128xf32> -> vector<8x128xf32>
    %238 = arith.addf %235, %237 : vector<8x128xf32>
    %239 = vector.extract_strided_slice %238 {offsets = [0, 0], sizes = [8, 96], strides = [1, 1]} : vector<8x128xf32> to vector<8x96xf32>
    %240 = arith.negf %239 : vector<8x96xf32>
    %241 = math.exp %240 : vector<8x96xf32>
    %cst_72 = arith.constant 1.000000e+00 : f32
    %242 = vector.broadcast %cst_72 : f32 to vector<8x96xf32>
    %243 = arith.addf %242, %241 : vector<8x96xf32>
    %244 = arith.divf %242, %243 : vector<8x96xf32>
    %245 = vector.extract_strided_slice %238 {offsets = [0, 96], sizes = [8, 32], strides = [1, 1]} : vector<8x128xf32> to vector<8x32xf32>
    %246 = math.tanh %245 : vector<8x32xf32>
    %247 = vector.extract_strided_slice %244 {offsets = [0, 0], sizes = [8, 32], strides = [1, 1]} : vector<8x96xf32> to vector<8x32xf32>
    %248 = vector.extract_strided_slice %244 {offsets = [0, 32], sizes = [8, 32], strides = [1, 1]} : vector<8x96xf32> to vector<8x32xf32>
    %249 = vector.extract_strided_slice %244 {offsets = [0, 64], sizes = [8, 32], strides = [1, 1]} : vector<8x96xf32> to vector<8x32xf32>
    %250 = arith.mulf %248, %219 : vector<8x32xf32>
    %251 = arith.mulf %247, %246 : vector<8x32xf32>
    %252 = arith.addf %250, %251 : vector<8x32xf32>
    %253 = math.tanh %252 : vector<8x32xf32>
    %254 = arith.mulf %249, %253 : vector<8x32xf32>
    %255 = vector.broadcast %232 : i32 to vector<8x1xi32>
    %256 = arith.cmpi sgt, %4, %255 : vector<8x1xi32>
    %257 = vector.broadcast %7 : vector<1x32xi1> to vector<8x32xi1>
    %258 = vector.broadcast %256 : vector<8x1xi1> to vector<8x32xi1>
    %259 = arith.ori %257, %258 : vector<8x32xi1>
    %cst_73 = arith.constant 0.000000e+00 : f32
    %260 = vector.broadcast %cst_73 : f32 to vector<8x32xf32>
    %261 = arith.select %259, %254, %260 : vector<8x32xi1>, vector<8x32xf32>
    %cst_74 = arith.constant 0.000000e+00 : f32
    %262 = vector.broadcast %cst_74 : f32 to vector<8x32xf32>
    %263 = arith.select %259, %252, %262 : vector<8x32xi1>, vector<8x32xf32>
    %264 = vector.extract_strided_slice %261 {offsets = [0, 0], sizes = [8, 16], strides = [1, 1]} : vector<8x32xf32> to vector<8x16xf32>
    %265 = arith.index_cast %231 : i32 to index
    %c0_75 = arith.constant 0 : index
    %c0_76 = arith.constant 0 : index
    %266 = vector.load %arg9[%265, %c0_75, %c0_76] : memref<8x8x16xf32, #tpu.memory_space<vmem>>, vector<1x8x16xf32>
    %267 = vector.shape_cast %266 : vector<1x8x16xf32> to vector<8x16xf32>
    %268 = vector.shape_cast %264 : vector<8x16xf32> to vector<1x8x16xf32>
    tpu.vector_store %arg9[%265, %c0_75, %c0_76], %268 {strides = array<i32>} : memref<8x8x16xf32, #tpu.memory_space<vmem>>, vector<1x8x16xf32>,
    %269 = vector.extract_strided_slice %261 {offsets = [0, 16], sizes = [8, 16], strides = [1, 1]} : vector<8x32xf32> to vector<8x16xf32>
    %270 = arith.index_cast %232 : i32 to index
    %c0_77 = arith.constant 0 : index
    %c0_78 = arith.constant 0 : index
    %271 = vector.load %arg10[%270, %c0_77, %c0_78] : memref<8x8x16xf32, #tpu.memory_space<vmem>>, vector<1x8x16xf32>
    %272 = vector.shape_cast %271 : vector<1x8x16xf32> to vector<8x16xf32>
    %273 = vector.shape_cast %269 : vector<8x16xf32> to vector<1x8x16xf32>
    tpu.vector_store %arg10[%270, %c0_77, %c0_78], %273 {strides = array<i32>} : memref<8x8x16xf32, #tpu.memory_space<vmem>>, vector<1x8x16xf32>,
    %c8_i32_79 = arith.constant 8 : i32
    %274 = arith.muli %arg0, %c8_i32_79 : i32
    %c6_i32 = arith.constant 6 : i32
    %275 = arith.addi %274, %c6_i32 : i32
    %c7_i32_80 = arith.constant 7 : i32
    %276 = arith.subi %c7_i32_80, %275 : i32
    %c6 = arith.constant 6 : index
    %c0_81 = arith.constant 0 : index
    %c0_82 = arith.constant 0 : index
    %277 = vector.load %arg1[%c6, %c0_81, %c0_82] : memref<8x8x128xbf16, #tpu.memory_space<vmem>>, vector<1x8x128xbf16>
    %278 = vector.shape_cast %277 : vector<1x8x128xbf16> to vector<8x128xbf16>
    %279 = arith.extf %278 : vector<8x128xbf16> to vector<8x128xf32>
    %280 = arith.truncf %261 : vector<8x32xf32> to vector<8x32xbf16>
    %cst_83 = arith.constant dense<0.000000e+00> : vector<8x128xf32>
    %281 = tpu.matmul %280, %3, %cst_83 {dimension_numbers = #tpu.dot_dimension_numbers<[1], [0], [0], [1], [0, 0, 1, 1], [], []>} : vector<8x32xbf16>, vector<32x128xbf16>, vector<8x128xf32> -> vector<8x128xf32>
    %282 = arith.addf %279, %281 : vector<8x128xf32>
    %283 = vector.extract_strided_slice %282 {offsets = [0, 0], sizes = [8, 96], strides = [1, 1]} : vector<8x128xf32> to vector<8x96xf32>
    %284 = arith.negf %283 : vector<8x96xf32>
    %285 = math.exp %284 : vector<8x96xf32>
    %cst_84 = arith.constant 1.000000e+00 : f32
    %286 = vector.broadcast %cst_84 : f32 to vector<8x96xf32>
    %287 = arith.addf %286, %285 : vector<8x96xf32>
    %288 = arith.divf %286, %287 : vector<8x96xf32>
    %289 = vector.extract_strided_slice %282 {offsets = [0, 96], sizes = [8, 32], strides = [1, 1]} : vector<8x128xf32> to vector<8x32xf32>
    %290 = math.tanh %289 : vector<8x32xf32>
    %291 = vector.extract_strided_slice %288 {offsets = [0, 0], sizes = [8, 32], strides = [1, 1]} : vector<8x96xf32> to vector<8x32xf32>
    %292 = vector.extract_strided_slice %288 {offsets = [0, 32], sizes = [8, 32], strides = [1, 1]} : vector<8x96xf32> to vector<8x32xf32>
    %293 = vector.extract_strided_slice %288 {offsets = [0, 64], sizes = [8, 32], strides = [1, 1]} : vector<8x96xf32> to vector<8x32xf32>
    %294 = arith.mulf %292, %263 : vector<8x32xf32>
    %295 = arith.mulf %291, %290 : vector<8x32xf32>
    %296 = arith.addf %294, %295 : vector<8x32xf32>
    %297 = math.tanh %296 : vector<8x32xf32>
    %298 = arith.mulf %293, %297 : vector<8x32xf32>
    %299 = vector.broadcast %276 : i32 to vector<8x1xi32>
    %300 = arith.cmpi sgt, %4, %299 : vector<8x1xi32>
    %301 = vector.broadcast %7 : vector<1x32xi1> to vector<8x32xi1>
    %302 = vector.broadcast %300 : vector<8x1xi1> to vector<8x32xi1>
    %303 = arith.ori %301, %302 : vector<8x32xi1>
    %cst_85 = arith.constant 0.000000e+00 : f32
    %304 = vector.broadcast %cst_85 : f32 to vector<8x32xf32>
    %305 = arith.select %303, %298, %304 : vector<8x32xi1>, vector<8x32xf32>
    %cst_86 = arith.constant 0.000000e+00 : f32
    %306 = vector.broadcast %cst_86 : f32 to vector<8x32xf32>
    %307 = arith.select %303, %296, %306 : vector<8x32xi1>, vector<8x32xf32>
    %308 = vector.extract_strided_slice %305 {offsets = [0, 0], sizes = [8, 16], strides = [1, 1]} : vector<8x32xf32> to vector<8x16xf32>
    %309 = arith.index_cast %275 : i32 to index
    %c0_87 = arith.constant 0 : index
    %c0_88 = arith.constant 0 : index
    %310 = vector.load %arg9[%309, %c0_87, %c0_88] : memref<8x8x16xf32, #tpu.memory_space<vmem>>, vector<1x8x16xf32>
    %311 = vector.shape_cast %310 : vector<1x8x16xf32> to vector<8x16xf32>
    %312 = vector.shape_cast %308 : vector<8x16xf32> to vector<1x8x16xf32>
    tpu.vector_store %arg9[%309, %c0_87, %c0_88], %312 {strides = array<i32>} : memref<8x8x16xf32, #tpu.memory_space<vmem>>, vector<1x8x16xf32>,
    %313 = vector.extract_strided_slice %305 {offsets = [0, 16], sizes = [8, 16], strides = [1, 1]} : vector<8x32xf32> to vector<8x16xf32>
    %314 = arith.index_cast %276 : i32 to index
    %c0_89 = arith.constant 0 : index
    %c0_90 = arith.constant 0 : index
    %315 = vector.load %arg10[%314, %c0_89, %c0_90] : memref<8x8x16xf32, #tpu.memory_space<vmem>>, vector<1x8x16xf32>
    %316 = vector.shape_cast %315 : vector<1x8x16xf32> to vector<8x16xf32>
    %317 = vector.shape_cast %313 : vector<8x16xf32> to vector<1x8x16xf32>
    tpu.vector_store %arg10[%314, %c0_89, %c0_90], %317 {strides = array<i32>} : memref<8x8x16xf32, #tpu.memory_space<vmem>>, vector<1x8x16xf32>,
    %c8_i32_91 = arith.constant 8 : i32
    %318 = arith.muli %arg0, %c8_i32_91 : i32
    %c7_i32_92 = arith.constant 7 : i32
    %319 = arith.addi %318, %c7_i32_92 : i32
    %c7_i32_93 = arith.constant 7 : i32
    %320 = arith.subi %c7_i32_93, %319 : i32
    %c7 = arith.constant 7 : index
    %c0_94 = arith.constant 0 : index
    %c0_95 = arith.constant 0 : index
    %321 = vector.load %arg1[%c7, %c0_94, %c0_95] : memref<8x8x128xbf16, #tpu.memory_space<vmem>>, vector<1x8x128xbf16>
    %322 = vector.shape_cast %321 : vector<1x8x128xbf16> to vector<8x128xbf16>
    %323 = arith.extf %322 : vector<8x128xbf16> to vector<8x128xf32>
    %324 = arith.truncf %305 : vector<8x32xf32> to vector<8x32xbf16>
    %cst_96 = arith.constant dense<0.000000e+00> : vector<8x128xf32>
    %325 = tpu.matmul %324, %3, %cst_96 {dimension_numbers = #tpu.dot_dimension_numbers<[1], [0], [0], [1], [0, 0, 1, 1], [], []>} : vector<8x32xbf16>, vector<32x128xbf16>, vector<8x128xf32> -> vector<8x128xf32>
    %326 = arith.addf %323, %325 : vector<8x128xf32>
    %327 = vector.extract_strided_slice %326 {offsets = [0, 0], sizes = [8, 96], strides = [1, 1]} : vector<8x128xf32> to vector<8x96xf32>
    %328 = arith.negf %327 : vector<8x96xf32>
    %329 = math.exp %328 : vector<8x96xf32>
    %cst_97 = arith.constant 1.000000e+00 : f32
    %330 = vector.broadcast %cst_97 : f32 to vector<8x96xf32>
    %331 = arith.addf %330, %329 : vector<8x96xf32>
    %332 = arith.divf %330, %331 : vector<8x96xf32>
    %333 = vector.extract_strided_slice %326 {offsets = [0, 96], sizes = [8, 32], strides = [1, 1]} : vector<8x128xf32> to vector<8x32xf32>
    %334 = math.tanh %333 : vector<8x32xf32>
    %335 = vector.extract_strided_slice %332 {offsets = [0, 0], sizes = [8, 32], strides = [1, 1]} : vector<8x96xf32> to vector<8x32xf32>
    %336 = vector.extract_strided_slice %332 {offsets = [0, 32], sizes = [8, 32], strides = [1, 1]} : vector<8x96xf32> to vector<8x32xf32>
    %337 = vector.extract_strided_slice %332 {offsets = [0, 64], sizes = [8, 32], strides = [1, 1]} : vector<8x96xf32> to vector<8x32xf32>
    %338 = arith.mulf %336, %307 : vector<8x32xf32>
    %339 = arith.mulf %335, %334 : vector<8x32xf32>
    %340 = arith.addf %338, %339 : vector<8x32xf32>
    %341 = math.tanh %340 : vector<8x32xf32>
    %342 = arith.mulf %337, %341 : vector<8x32xf32>
    %343 = vector.broadcast %320 : i32 to vector<8x1xi32>
    %344 = arith.cmpi sgt, %4, %343 : vector<8x1xi32>
    %345 = vector.broadcast %7 : vector<1x32xi1> to vector<8x32xi1>
    %346 = vector.broadcast %344 : vector<8x1xi1> to vector<8x32xi1>
    %347 = arith.ori %345, %346 : vector<8x32xi1>
    %cst_98 = arith.constant 0.000000e+00 : f32
    %348 = vector.broadcast %cst_98 : f32 to vector<8x32xf32>
    %349 = arith.select %347, %342, %348 : vector<8x32xi1>, vector<8x32xf32>
    %cst_99 = arith.constant 0.000000e+00 : f32
    %350 = vector.broadcast %cst_99 : f32 to vector<8x32xf32>
    %351 = arith.select %347, %340, %350 : vector<8x32xi1>, vector<8x32xf32>
    %352 = vector.extract_strided_slice %349 {offsets = [0, 0], sizes = [8, 16], strides = [1, 1]} : vector<8x32xf32> to vector<8x16xf32>
    %353 = arith.index_cast %319 : i32 to index
    %c0_100 = arith.constant 0 : index
    %c0_101 = arith.constant 0 : index
    %354 = vector.load %arg9[%353, %c0_100, %c0_101] : memref<8x8x16xf32, #tpu.memory_space<vmem>>, vector<1x8x16xf32>
    %355 = vector.shape_cast %354 : vector<1x8x16xf32> to vector<8x16xf32>
    %356 = vector.shape_cast %352 : vector<8x16xf32> to vector<1x8x16xf32>
    tpu.vector_store %arg9[%353, %c0_100, %c0_101], %356 {strides = array<i32>} : memref<8x8x16xf32, #tpu.memory_space<vmem>>, vector<1x8x16xf32>,
    %357 = vector.extract_strided_slice %349 {offsets = [0, 16], sizes = [8, 16], strides = [1, 1]} : vector<8x32xf32> to vector<8x16xf32>
    %358 = arith.index_cast %320 : i32 to index
    %c0_102 = arith.constant 0 : index
    %c0_103 = arith.constant 0 : index
    %359 = vector.load %arg10[%358, %c0_102, %c0_103] : memref<8x8x16xf32, #tpu.memory_space<vmem>>, vector<1x8x16xf32>
    %360 = vector.shape_cast %359 : vector<1x8x16xf32> to vector<8x16xf32>
    %361 = vector.shape_cast %357 : vector<8x16xf32> to vector<1x8x16xf32>
    tpu.vector_store %arg10[%358, %c0_102, %c0_103], %361 {strides = array<i32>} : memref<8x8x16xf32, #tpu.memory_space<vmem>>, vector<1x8x16xf32>,
    %c0_104 = arith.constant 0 : index
    %c0_105 = arith.constant 0 : index
    %362 = vector.load %arg7[%c0_104, %c0_105] : memref<8x32xf32, #tpu.memory_space<vmem>>, vector<8x32xf32>
    tpu.vector_store %arg7[%c0_104, %c0_105], %349 {strides = array<i32>} : memref<8x32xf32, #tpu.memory_space<vmem>>, vector<8x32xf32>,
    %c0_106 = arith.constant 0 : index
    %c0_107 = arith.constant 0 : index
    %363 = vector.load %arg8[%c0_106, %c0_107] : memref<8x32xf32, #tpu.memory_space<vmem>>, vector<8x32xf32>
    tpu.vector_store %arg8[%c0_106, %c0_107], %351 {strides = array<i32>} : memref<8x32xf32, #tpu.memory_space<vmem>>, vector<8x32xf32>,
    %c0_i32_108 = arith.constant 0 : i32
    %364 = arith.cmpi eq, %arg0, %c0_i32_108 : i32
    %365 = arith.extui %364 : i1 to i32
    %c0_i32_109 = arith.constant 0 : i32
    %366 = arith.cmpi ne, %365, %c0_i32_109 : i32
    scf.if %366 {
      %c0_110 = arith.constant 0 : index
      %c0_111 = arith.constant 0 : index
      %367 = vector.load %arg5[%c0_110, %c0_111] : memref<1x32xf32, #tpu.memory_space<vmem>>, vector<1x32xf32>
      %368 = vector.extract_strided_slice %367 {offsets = [0, 0], sizes = [1, 16], strides = [1, 1]} : vector<1x32xf32> to vector<1x16xf32>
      %369 = vector.shape_cast %368 : vector<1x16xf32> to vector<1x1x16xf32>
      %370 = vector.extract_strided_slice %367 {offsets = [0, 16], sizes = [1, 16], strides = [1, 1]} : vector<1x32xf32> to vector<1x16xf32>
      %371 = vector.shape_cast %370 : vector<1x16xf32> to vector<1x1x16xf32>
      %c0_112 = arith.constant 0 : index
      %c0_113 = arith.constant 0 : index
      %c0_114 = arith.constant 0 : index
      %372 = vector.load %arg9[%c0_112, %c0_113, %c0_114] : memref<8x8x16xf32, #tpu.memory_space<vmem>>, vector<8x8x16xf32>
      %373 = vector.broadcast %369 : vector<1x1x16xf32> to vector<8x8x16xf32>
      %374 = arith.mulf %372, %373 : vector<8x8x16xf32>
      %cst_115 = arith.constant dense<0.000000e+00> : vector<8x8xf32>
      %375 = vector.multi_reduction <add>, %374, %cst_115 [2] : vector<8x8x16xf32> to vector<8x8xf32>
      %c0_116 = arith.constant 0 : index
      %c0_117 = arith.constant 0 : index
      %c0_118 = arith.constant 0 : index
      %376 = vector.load %arg10[%c0_116, %c0_117, %c0_118] : memref<8x8x16xf32, #tpu.memory_space<vmem>>, vector<8x8x16xf32>
      %377 = vector.broadcast %371 : vector<1x1x16xf32> to vector<8x8x16xf32>
      %378 = arith.mulf %376, %377 : vector<8x8x16xf32>
      %cst_119 = arith.constant dense<0.000000e+00> : vector<8x8xf32>
      %379 = vector.multi_reduction <add>, %378, %cst_119 [2] : vector<8x8x16xf32> to vector<8x8xf32>
      %380 = arith.addf %375, %379 : vector<8x8xf32>
      %381 = tpu.iota {dimensions = array<i32: 0>} : vector<8x8xi32>
      %c0_120 = arith.constant 0 : index
      %c0_121 = arith.constant 0 : index
      %382 = vector.load %arg3[%c0_120, %c0_121] : memref<1x8xi32, #tpu.memory_space<vmem>>, vector<1x8xi32>
      %383 = vector.broadcast %382 : vector<1x8xi32> to vector<8x8xi32>
      %384 = arith.cmpi slt, %381, %383 : vector<8x8xi32>
      %cst_122 = arith.constant 0xFF800000 : f32
      %385 = vector.broadcast %cst_122 : f32 to vector<8x8xf32>
      %386 = arith.select %384, %380, %385 : vector<8x8xi1>, vector<8x8xf32>
      %cst_123 = arith.constant dense<0xFF800000> : vector<8xf32>
      %387 = vector.multi_reduction <maximumf>, %386, %cst_123 [1] : vector<8x8xf32> to vector<8xf32>
      %388 = vector.shape_cast %387 : vector<8xf32> to vector<8x1xf32>
      %cst_124 = arith.constant -1.000000e+30 : f32
      %389 = vector.broadcast %cst_124 : f32 to vector<8x1xf32>
      %390 = arith.maximumf %388, %389 : vector<8x1xf32>
      %391 = vector.broadcast %390 : vector<8x1xf32> to vector<8x8xf32>
      %392 = arith.subf %386, %391 : vector<8x8xf32>
      %393 = math.exp %392 : vector<8x8xf32>
      %cst_125 = arith.constant dense<0.000000e+00> : vector<8xf32>
      %394 = vector.multi_reduction <add>, %393, %cst_125 [1] : vector<8x8xf32> to vector<8xf32>
      %395 = vector.shape_cast %394 : vector<8xf32> to vector<8x1xf32>
      %cst_126 = arith.constant 1.000000e-30 : f32
      %396 = vector.broadcast %cst_126 : f32 to vector<8x1xf32>
      %397 = arith.maximumf %395, %396 : vector<8x1xf32>
      %398 = vector.broadcast %397 : vector<8x1xf32> to vector<8x8xf32>
      %399 = arith.divf %393, %398 : vector<8x8xf32>
      %400 = arith.sitofp %382 : vector<1x8xi32> to vector<1x8xf32>
      %cst_127 = arith.constant 1.000000e+00 : f32
      %401 = vector.broadcast %cst_127 : f32 to vector<1x8xf32>
      %402 = arith.maximumf %400, %401 : vector<1x8xf32>
      %cst_128 = arith.constant 7.500000e-01 : f32
      %403 = vector.broadcast %cst_128 : f32 to vector<8x8xf32>
      %404 = arith.mulf %403, %399 : vector<8x8xf32>
      %cst_129 = arith.constant 2.500000e-01 : f32
      %405 = vector.broadcast %cst_129 : f32 to vector<1x8xf32>
      %406 = arith.divf %405, %402 : vector<1x8xf32>
      %407 = vector.broadcast %406 : vector<1x8xf32> to vector<8x8xf32>
      %408 = arith.addf %404, %407 : vector<8x8xf32>
      %cst_130 = arith.constant 0.000000e+00 : f32
      %409 = vector.broadcast %cst_130 : f32 to vector<8x1xf32>
      %410 = arith.cmpf ogt, %395, %409 : vector<8x1xf32>
      %cst_131 = arith.constant 0.000000e+00 : f32
      %411 = vector.shape_cast %410 : vector<8x1xi1> to vector<8x1xi1>
      %412 = vector.broadcast %411 : vector<8x1xi1> to vector<8x8xi1>
      %413 = vector.broadcast %cst_131 : f32 to vector<8x8xf32>
      %414 = arith.select %412, %408, %413 : vector<8x8xi1>, vector<8x8xf32>
      %c0_132 = arith.constant 0 : index
      %c0_133 = arith.constant 0 : index
      %415 = vector.load %arg6[%c0_132, %c0_133] : memref<8x8xf32, #tpu.memory_space<vmem>>, vector<8x8xf32>
      tpu.vector_store %arg6[%c0_132, %c0_133], %414 {strides = array<i32>} : memref<8x8xf32, #tpu.memory_space<vmem>>, vector<8x8xf32>,
    } else {
    }
    return
  }
  func.func @transform_0(%arg0: i32) -> (i32, i32, i32) {
    %c0_i32 = arith.constant 0 : i32
    %c0_i32_0 = arith.constant 0 : i32
    %c0_i32_1 = arith.constant 0 : i32
    return %arg0, %c0_i32, %c0_i32_0 : i32, i32, i32
  }
  func.func @transform_1(%arg0: i32) -> (i32, i32) {
    %c0_i32 = arith.constant 0 : i32
    %c0_i32_0 = arith.constant 0 : i32
    %c0_i32_1 = arith.constant 0 : i32
    return %c0_i32, %c0_i32_0 : i32, i32
  }
  func.func @transform_2(%arg0: i32) -> (i32, i32) {
    %c0_i32 = arith.constant 0 : i32
    %c0_i32_0 = arith.constant 0 : i32
    %c0_i32_1 = arith.constant 0 : i32
    return %c0_i32, %c0_i32_0 : i32, i32
  }
  func.func @transform_3(%arg0: i32) -> (i32, i32) {
    %c0_i32 = arith.constant 0 : i32
    %c0_i32_0 = arith.constant 0 : i32
    %c0_i32_1 = arith.constant 0 : i32
    return %c0_i32, %c0_i32_0 : i32, i32
  }
  func.func @transform_4(%arg0: i32) -> (i32, i32) {
    %c0_i32 = arith.constant 0 : i32
    %c0_i32_0 = arith.constant 0 : i32
    %c0_i32_1 = arith.constant 0 : i32
    return %c0_i32, %c0_i32_0 : i32, i32
  }
  func.func @transform_5(%arg0: i32) -> (i32, i32) {
    %c0_i32 = arith.constant 0 : i32
    %c0_i32_0 = arith.constant 0 : i32
    %c0_i32_1 = arith.constant 0 : i32
    return %c0_i32, %c0_i32_0 : i32, i32
  }
}

</mosaic_0001>

<llo_original>
// kernel: tpu_custom_call.1
$region0: #{tpu_custom_call.1}
  #allocation0 [shape = 'u32[]', space=smem, size = 0x4, offset = 0x4, fixed_abs, tag = 'smem constant byte address 0x4 - core index']
  #allocation1 [shape = 'u32[144,128]{1,0:T(1,128)}', space=vmem, size = 0x12000, scoped, tag = 'internal scratch']
  #allocation2 [shape = 'f32[8,32]{1,0:T(8,128)}', space=vmem, size = 0x1000, scoped, tag = 'scratch operand']
  #allocation3 [shape = 'f32[8,32]{1,0:T(8,128)}', space=vmem, size = 0x1000, scoped, tag = 'scratch operand']
  #allocation4 [shape = 'f32[8,8,16]{2,1,0:T(8,128)}', space=vmem, size = 0x8000, scoped, tag = 'scratch operand']
  #allocation5 [shape = 'f32[8,8,16]{2,1,0:T(8,128)}', space=vmem, size = 0x8000, scoped, tag = 'scratch operand']
  %s0 = inlined_call_operand.hbm [shape: bf16[8,8,128], index: 0, kind: input, shape index: {}]
  %s1 = inlined_call_operand.vmem [shape: s32[8,1], index: 1, kind: input, shape index: {}]
  %s2 = inlined_call_operand.vmem [shape: s32[1,8], index: 2, kind: input, shape index: {}]
  %s3 = inlined_call_operand.vmem [shape: bf16[32,128], index: 3, kind: input, shape index: {}]
  %s4 = inlined_call_operand.vmem [shape: f32[1,32], index: 4, kind: input, shape index: {}]
  %s5 = inlined_call_operand.hbm [shape: f32[8,8], index: 5, kind: output, shape index: {}]
  %s6 = sld [smem:[#allocation0]]
  $region42: #{tpu_custom_call.1} parent=0
    _
  %s8 = ssub.s32 1, %s6
  %s9 = scalar_select 0, %s8, %s6
  $region1: #{tpu_custom_call.1} parent=0
    #allocation6 [shape = 'u8[16384]{0}', space=vmem, size = 0x4000, scoped, tag = 'input window, operand 0, single buffered']
    #allocation7 [shape = 's32[1]{0}', space=sflag, size = 0x4, scoped, tag = 'scoped memory for tpu_custom_call.1']
    #allocation8 [shape = 's32[1]{0}', space=sflag, size = 0x4, scoped, tag = 'scoped memory for tpu_custom_call.1']
    #allocation9 [shape = 'u8[4096]{0}', space=vmem, size = 0x1000, scoped, tag = 'output window, operand 0, single buffered']
    %10 = vsyncpa [#allocation7], 0
    %11 = vsyncpa [#allocation8], 0
    // Predicated region
    $region2: #{tpu_custom_call.1} parent=1 // pred_check
      _
    $region3: #{tpu_custom_call.1} parent=1 // pred_check_branch
      %13 = sbr.rel (0) target = $region5
    $region4: #{tpu_custom_call.1} parent=1 // pred_region
      %s15 = ssub.s32 512, 512
      %16 = vsyncadd [#allocation7], %s15
      %s17 = sshll.u32 [#allocation6], 4
      %s18 = int_to_ptr.vmem [resolvable:$true] %s17
      %23 = dma.hbm_to_vmem [thread:$0]  %s0, 512, %s18, [#allocation7], 64, 64, 4
    $region5: #{tpu_custom_call.1} parent=1 // pred_fallthru
      _
    // Predicated region
    $region6: #{tpu_custom_call.1} parent=1 // pred_check
      _
    $region7: #{tpu_custom_call.1} parent=1 // pred_check_branch
      %25 = sbr.rel (0) target = $region9
    $region8: #{tpu_custom_call.1} parent=1 // pred_region
      _
    $region9: #{tpu_custom_call.1} parent=1 // pred_fallthru
      _
    // Predicated region
    $region10: #{tpu_custom_call.1} parent=1 // pred_check
      _
    $region11: #{tpu_custom_call.1} parent=1 // pred_check_branch
      %27 = sbr.rel (0) target = $region13
    $region12: #{tpu_custom_call.1} parent=1 // pred_region
      _
    $region13: #{tpu_custom_call.1} parent=1 // pred_fallthru
      _
    // Predicated region
    $region14: #{tpu_custom_call.1} parent=1 // pred_check
      _
    $region15: #{tpu_custom_call.1} parent=1 // pred_check_branch
      %29 = sbr.rel (0) target = $region17
    $region16: #{tpu_custom_call.1} parent=1 // pred_region
      _
    $region17: #{tpu_custom_call.1} parent=1 // pred_fallthru
      _
    // Predicated region
    $region18: #{tpu_custom_call.1} parent=1 // pred_check
      _
    $region19: #{tpu_custom_call.1} parent=1 // pred_check_branch
      %31 = sbr.rel (0) target = $region21
    $region20: #{tpu_custom_call.1} parent=1 // pred_region
      _
    $region21: #{tpu_custom_call.1} parent=1 // pred_fallthru
      _
    // Predicated region
    $region22: #{tpu_custom_call.1} parent=1 // pred_check
      _
    $region23: #{tpu_custom_call.1} parent=1 // pred_check_branch
      %33 = sbr.rel (0) target = $region25
    $region24: #{tpu_custom_call.1} parent=1 // pred_region
      %34 = dma.done [#allocation7], 512
    $region25: #{tpu_custom_call.1} parent=1 // pred_fallthru
      _
    %p36 = scmp.eq.s32.totalorder 0, 0
    // Predicated region
    $region26: #{tpu_custom_call.1} parent=1 // pred_check
      %p37 = pneg %p36
    $region27: #{tpu_custom_call.1} parent=1 // pred_check_branch
      %39 = sbr.rel (%p37) target = $region29
    $region28: #{tpu_custom_call.1} parent=1 // pred_region
      %vm40 = vcmask 261120
      %41 = vst.msk [vmem:[#allocation2] sm:$0xff] %vm40, 0.0
      %42 = vst.msk [vmem:[#allocation3] sm:$0xff] %vm40, 0.0
    $region29: #{tpu_custom_call.1} parent=1 // pred_fallthru
      _
    %v43 = vld [vmem:[%s3] sm:$0xf]
    %v44 = vld [vmem:[%s3 + $0x4] sm:$0xf]
    %v45 = vld [vmem:[%s3 + $0x8] sm:$0xf]
    %v46 = vld [vmem:[%s3 + $0xc] sm:$0xf]
    %v47 = vld [vmem:[%s1] sm:$0xff]
    %v48 = vlaneseq
    %v49 = vand.u32 %v48, 127
    %vm50 = vcmp.lt.s32.totalorder %v49, 16
    %v51 = vld [vmem:[#allocation2] sm:$0xff]
    %v52 = vld [vmem:[#allocation3] sm:$0xff]
    %s53 = smul.u32 0, 8
    %s54 = ssub.s32 7, %s53
    %v55 = vld [vmem:[#allocation6] sm:$0xf]
    %v56 = vunpack.c.l.bf16 %v55
    %v57 = vpack.c.bf16 %v51, %v51
    %v62 = vunpack.c.l.b16 %v43
    %v63 = vunpack.c.l.b16 %v44
    %v64 = vunpack.c.l.b16 %v45
    %v65 = vunpack.c.l.b16 %v46
    %v66 = vpack.c.b16 %v63, %v62
    %v67 = vpack.c.b16 %v65, %v64
    %vm70 = vcmask 261120
    %v72 = vsel %vm70, %v57, 0
    %74 = vmatprep.subr.bf16.mxu0 0
    %75 = vmatpush1.bf16.msra.mxu0 %v66
    %76 = vmatprep.subr.bf16.mxu0 0
    %77 = vmatpush1.bf16.msra.mxu0 %v67
    %78 = vmatprep.subr.bf16.mxu0 0
    %79 = vmatpush1.bf16.msra.mxu0 0
    %80 = vmatprep.subr.bf16.mxu0 0
    %81 = vmatpush1.bf16.msra.mxu0 0
    %82 = vmatprep.subr.bf16.mxu0 0
    %83 = vmatpush1.bf16.msra.mxu0 0
    %84 = vmatprep.subr.bf16.mxu0 0
    %85 = vmatpush1.bf16.msra.mxu0 0
    %86 = vmatprep.subr.bf16.mxu0 0
    %87 = vmatpush1.bf16.msra.mxu0 0
    %88 = vmatprep.subr.bf16.mxu0 0
    %89 = vmatpush1.bf16.msra.mxu0 0
    %90 = vmatprep.subr.bf16.mxu0 0
    %91 = vmatpush1.bf16.msra.mxu0 0
    %92 = vmatprep.subr.bf16.mxu0 0
    %93 = vmatpush1.bf16.msra.mxu0 0
    %94 = vmatprep.subr.bf16.mxu0 0
    %95 = vmatpush1.bf16.msra.mxu0 0
    %96 = vmatprep.subr.bf16.mxu0 0
    %97 = vmatpush1.bf16.msra.mxu0 0
    %98 = vmatprep.subr.bf16.mxu0 0
    %99 = vmatpush1.bf16.msra.mxu0 0
    %100 = vmatprep.subr.bf16.mxu0 0
    %101 = vmatpush1.bf16.msra.mxu0 0
    %102 = vmatprep.subr.bf16.mxu0 0
    %103 = vmatpush1.bf16.msra.mxu0 0
    %104 = vmatprep.subr.bf16.mxu0 0
    %105 = vmatpush1.bf16.msra.mxu0 0
    %106 = vmatprep.mubr.bf16.mxu0 0
    %107 = vmatmul.mubr.bf16.gmra.mrb[0].mxu0 %v72
    %v108 = vpop.f32.mrb[0].mxu0
    %v109 = vadd.f32 0.0, %v108
    %v110 = vpop.f32.mrb[0].mxu0
    %v111 = vpop.f32.mrb[0].mxu0
    %v112 = vpop.f32.mrb[0].mxu0
    %113 = vdwg.mxu0
    %v114 = vadd.f32 %v56, %v109
    %v115 = vxor.u32 %v114, 2147483648
    %v116 = vmul.f32 %v115, 1.442695
    %v117 = vpow.pop %v116
    %v118 = vadd.f32 %v117, 1.0
    %v119 = vrcp.pop %v118
    %v120 = vmul.f32 1.0, %v119
    %v121 = vtanh.pop %v114
    %123 = vrot.lane.b32.xlu0 %v52, 32
    %v124 = vpop.permute.xlu0 %123
    %v126 = vmul.f32 %v120, %v124
    %128 = vrot.lane.b32.xlu0 %v121, 32
    %v129 = vpop.permute.xlu0 %128
    %v131 = vmul.f32 %v120, %v129
    %133 = vrot.lane.b32.xlu0 %v131, 32
    %v134 = vpop.permute.xlu0 %133
    %v136 = vadd.f32 %v126, %v134
    %v137 = vtanh.pop %v136
    %139 = vrot.lane.b32.xlu0 %v137, 32
    %v140 = vpop.permute.xlu0 %139
    %v142 = vmul.f32 %v120, %v140
    %v143 = vstv %s54
    %vm144 = vcmp.gt.s32.totalorder %v47, %v143
    %v145 = vsel %vm50, 1, 0
    %vm146 = vcmp.eq.s32.totalorder %v145, 1
    %v147 = vsel %vm144, 1, 0
    %148 = vset.pattern.permute.xlu0 0
    %149 = vperm.xlu0 %148, %v147
    %v150 = vpop.permute.xlu0 %149
    %vm151 = vcmp.eq.s32.totalorder %v150, 1
    %vm152 = vmor %vm146, %vm151
    %154 = vrot.lane.b32.xlu0 %v142, 64
    %v155 = vpop.permute.xlu0 %154
    %v157 = vsel %vm152, %v155, 0.0
    %159 = vrot.lane.b32.xlu0 %v136, 96
    %v160 = vpop.permute.xlu0 %159
    %v162 = vsel %vm152, %v160, 0.0
    %s163 = smul.u32 %s53, 8
    %s164 = scalar_lea.vmem [#allocation4], %s163
    %vm165 = vcmask 130048
    %166 = vst.msk [vmem:[%s164] sm:$0xff] %vm165, %v157
    %168 = vrot.lane.b32.xlu0 %v157, 112
    %v169 = vpop.permute.xlu0 %168
    %s171 = smul.u32 %s54, 8
    %s172 = scalar_lea.vmem [#allocation5], %s171
    %173 = vst.msk [vmem:[%s172] sm:$0xff] %vm165, %v169
    %s174 = sadd.s32 %s53, 1
    %s175 = ssub.s32 6, %s53
    %s176 = scalar_lea.vmem [#allocation6], 4
    %v177 = vld [vmem:[%s176] sm:$0xf]
    %v178 = vunpack.c.l.bf16 %v177
    %v179 = vpack.c.bf16 %v157, %v157
    %v181 = vsel %vm70, %v179, 0
    %183 = vmatprep.subr.bf16.mxu0 0
    %184 = vmatpush1.bf16.msra.mxu0 %v66
    %185 = vmatprep.subr.bf16.mxu0 0
    %186 = vmatpush1.bf16.msra.mxu0 %v67
    %187 = vmatprep.subr.bf16.mxu0 0
    %188 = vmatpush1.bf16.msra.mxu0 0
    %189 = vmatprep.subr.bf16.mxu0 0
    %190 = vmatpush1.bf16.msra.mxu0 0
    %191 = vmatprep.subr.bf16.mxu0 0
    %192 = vmatpush1.bf16.msra.mxu0 0
    %193 = vmatprep.subr.bf16.mxu0 0
    %194 = vmatpush1.bf16.msra.mxu0 0
    %195 = vmatprep.subr.bf16.mxu0 0
    %196 = vmatpush1.bf16.msra.mxu0 0
    %197 = vmatprep.subr.bf16.mxu0 0
    %198 = vmatpush1.bf16.msra.mxu0 0
    %199 = vmatprep.subr.bf16.mxu0 0
    %200 = vmatpush1.bf16.msra.mxu0 0
    %201 = vmatprep.subr.bf16.mxu0 0
    %202 = vmatpush1.bf16.msra.mxu0 0
    %203 = vmatprep.subr.bf16.mxu0 0
    %204 = vmatpush1.bf16.msra.mxu0 0
    %205 = vmatprep.subr.bf16.mxu0 0
    %206 = vmatpush1.bf16.msra.mxu0 0
    %207 = vmatprep.subr.bf16.mxu0 0
    %208 = vmatpush1.bf16.msra.mxu0 0
    %209 = vmatprep.subr.bf16.mxu0 0
    %210 = vmatpush1.bf16.msra.mxu0 0
    %211 = vmatprep.subr.bf16.mxu0 0
    %212 = vmatpush1.bf16.msra.mxu0 0
    %213 = vmatprep.subr.bf16.mxu0 0
    %214 = vmatpush1.bf16.msra.mxu0 0
    %215 = vmatprep.mubr.bf16.mxu0 0
    %216 = vmatmul.mubr.bf16.gmra.mrb[0].mxu0 %v181
    %v217 = vpop.f32.mrb[0].mxu0
    %v218 = vadd.f32 0.0, %v217
    %v219 = vpop.f32.mrb[0].mxu0
    %v220 = vpop.f32.mrb[0].mxu0
    %v221 = vpop.f32.mrb[0].mxu0
    %222 = vdwg.mxu0
    %v223 = vadd.f32 %v178, %v218
    %v224 = vxor.u32 %v223, 2147483648
    %v225 = vmul.f32 %v224, 1.442695
    %v226 = vpow.pop %v225
    %v227 = vadd.f32 %v226, 1.0
    %v228 = vrcp.pop %v227
    %v229 = vmul.f32 1.0, %v228
    %v230 = vtanh.pop %v223
    %232 = vrot.lane.b32.xlu0 %v162, 32
    %v233 = vpop.permute.xlu0 %232
    %v235 = vmul.f32 %v229, %v233
    %237 = vrot.lane.b32.xlu0 %v230, 32
    %v238 = vpop.permute.xlu0 %237
    %v240 = vmul.f32 %v229, %v238
    %242 = vrot.lane.b32.xlu0 %v240, 32
    %v243 = vpop.permute.xlu0 %242
    %v245 = vadd.f32 %v235, %v243
    %v246 = vtanh.pop %v245
    %248 = vrot.lane.b32.xlu0 %v246, 32
    %v249 = vpop.permute.xlu0 %248
    %v251 = vmul.f32 %v229, %v249
    %v252 = vstv %s175
    %vm253 = vcmp.gt.s32.totalorder %v47, %v252
    %v254 = vsel %vm253, 1, 0
    %255 = vset.pattern.permute.xlu0 0
    %256 = vperm.xlu0 %255, %v254
    %v257 = vpop.permute.xlu0 %256
    %vm258 = vcmp.eq.s32.totalorder %v257, 1
    %vm259 = vmor %vm146, %vm258
    %261 = vrot.lane.b32.xlu0 %v251, 64
    %v262 = vpop.permute.xlu0 %261
    %v264 = vsel %vm259, %v262, 0.0
    %266 = vrot.lane.b32.xlu0 %v245, 96
    %v267 = vpop.permute.xlu0 %266
    %v269 = vsel %vm259, %v267, 0.0
    %s270 = smul.u32 %s174, 8
    %s271 = scalar_lea.vmem [#allocation4], %s270
    %272 = vst.msk [vmem:[%s271] sm:$0xff] %vm165, %v264
    %274 = vrot.lane.b32.xlu0 %v264, 112
    %v275 = vpop.permute.xlu0 %274
    %s277 = smul.u32 %s175, 8
    %s278 = scalar_lea.vmem [#allocation5], %s277
    %279 = vst.msk [vmem:[%s278] sm:$0xff] %vm165, %v275
    %s280 = sadd.s32 %s53, 2
    %s281 = ssub.s32 5, %s53
    %s282 = scalar_lea.vmem [#allocation6], 8
    %v283 = vld [vmem:[%s282] sm:$0xf]
    %v284 = vunpack.c.l.bf16 %v283
    %v285 = vpack.c.bf16 %v264, %v264
    %v287 = vsel %vm70, %v285, 0
    %289 = vmatprep.subr.bf16.mxu0 0
    %290 = vmatpush1.bf16.msra.mxu0 %v66
    %291 = vmatprep.subr.bf16.mxu0 0
    %292 = vmatpush1.bf16.msra.mxu0 %v67
    %293 = vmatprep.subr.bf16.mxu0 0
    %294 = vmatpush1.bf16.msra.mxu0 0
    %295 = vmatprep.subr.bf16.mxu0 0
    %296 = vmatpush1.bf16.msra.mxu0 0
    %297 = vmatprep.subr.bf16.mxu0 0
    %298 = vmatpush1.bf16.msra.mxu0 0
    %299 = vmatprep.subr.bf16.mxu0 0
    %300 = vmatpush1.bf16.msra.mxu0 0
    %301 = vmatprep.subr.bf16.mxu0 0
    %302 = vmatpush1.bf16.msra.mxu0 0
    %303 = vmatprep.subr.bf16.mxu0 0
    %304 = vmatpush1.bf16.msra.mxu0 0
    %305 = vmatprep.subr.bf16.mxu0 0
    %306 = vmatpush1.bf16.msra.mxu0 0
    %307 = vmatprep.subr.bf16.mxu0 0
    %308 = vmatpush1.bf16.msra.mxu0 0
    %309 = vmatprep.subr.bf16.mxu0 0
    %310 = vmatpush1.bf16.msra.mxu0 0
    %311 = vmatprep.subr.bf16.mxu0 0
    %312 = vmatpush1.bf16.msra.mxu0 0
    %313 = vmatprep.subr.bf16.mxu0 0
    %314 = vmatpush1.bf16.msra.mxu0 0
    %315 = vmatprep.subr.bf16.mxu0 0
    %316 = vmatpush1.bf16.msra.mxu0 0
    %317 = vmatprep.subr.bf16.mxu0 0
    %318 = vmatpush1.bf16.msra.mxu0 0
    %319 = vmatprep.subr.bf16.mxu0 0
    %320 = vmatpush1.bf16.msra.mxu0 0
    %321 = vmatprep.mubr.bf16.mxu0 0
    %322 = vmatmul.mubr.bf16.gmra.mrb[0].mxu0 %v287
    %v323 = vpop.f32.mrb[0].mxu0
    %v324 = vadd.f32 0.0, %v323
    %v325 = vpop.f32.mrb[0].mxu0
    %v326 = vpop.f32.mrb[0].mxu0
    %v327 = vpop.f32.mrb[0].mxu0
    %328 = vdwg.mxu0
    %v329 = vadd.f32 %v284, %v324
    %v330 = vxor.u32 %v329, 2147483648
    %v331 = vmul.f32 %v330, 1.442695
    %v332 = vpow.pop %v331
    %v333 = vadd.f32 %v332, 1.0
    %v334 = vrcp.pop %v333
    %v335 = vmul.f32 1.0, %v334
    %v336 = vtanh.pop %v329
    %338 = vrot.lane.b32.xlu0 %v269, 32
    %v339 = vpop.permute.xlu0 %338
    %v341 = vmul.f32 %v335, %v339
    %343 = vrot.lane.b32.xlu0 %v336, 32
    %v344 = vpop.permute.xlu0 %343
    %v346 = vmul.f32 %v335, %v344
    %348 = vrot.lane.b32.xlu0 %v346, 32
    %v349 = vpop.permute.xlu0 %348
    %v351 = vadd.f32 %v341, %v349
    %v352 = vtanh.pop %v351
    %354 = vrot.lane.b32.xlu0 %v352, 32
    %v355 = vpop.permute.xlu0 %354
    %v357 = vmul.f32 %v335, %v355
    %v358 = vstv %s281
    %vm359 = vcmp.gt.s32.totalorder %v47, %v358
    %v360 = vsel %vm359, 1, 0
    %361 = vset.pattern.permute.xlu0 0
    %362 = vperm.xlu0 %361, %v360
    %v363 = vpop.permute.xlu0 %362
    %vm364 = vcmp.eq.s32.totalorder %v363, 1
    %vm365 = vmor %vm146, %vm364
    %367 = vrot.lane.b32.xlu0 %v357, 64
    %v368 = vpop.permute.xlu0 %367
    %v370 = vsel %vm365, %v368, 0.0
    %372 = vrot.lane.b32.xlu0 %v351, 96
    %v373 = vpop.permute.xlu0 %372
    %v375 = vsel %vm365, %v373, 0.0
    %s376 = smul.u32 %s280, 8
    %s377 = scalar_lea.vmem [#allocation4], %s376
    %378 = vst.msk [vmem:[%s377] sm:$0xff] %vm165, %v370
    %380 = vrot.lane.b32.xlu0 %v370, 112
    %v381 = vpop.permute.xlu0 %380
    %s383 = smul.u32 %s281, 8
    %s384 = scalar_lea.vmem [#allocation5], %s383
    %385 = vst.msk [vmem:[%s384] sm:$0xff] %vm165, %v381
    %s386 = sadd.s32 %s53, 3
    %s387 = ssub.s32 4, %s53
    %s388 = scalar_lea.vmem [#allocation6], 12
    %v389 = vld [vmem:[%s388] sm:$0xf]
    %v390 = vunpack.c.l.bf16 %v389
    %v391 = vpack.c.bf16 %v370, %v370
    %v393 = vsel %vm70, %v391, 0
    %395 = vmatprep.subr.bf16.mxu0 0
    %396 = vmatpush1.bf16.msra.mxu0 %v66
    %397 = vmatprep.subr.bf16.mxu0 0
    %398 = vmatpush1.bf16.msra.mxu0 %v67
    %399 = vmatprep.subr.bf16.mxu0 0
    %400 = vmatpush1.bf16.msra.mxu0 0
    %401 = vmatprep.subr.bf16.mxu0 0
    %402 = vmatpush1.bf16.msra.mxu0 0
    %403 = vmatprep.subr.bf16.mxu0 0
    %404 = vmatpush1.bf16.msra.mxu0 0
    %405 = vmatprep.subr.bf16.mxu0 0
    %406 = vmatpush1.bf16.msra.mxu0 0
    %407 = vmatprep.subr.bf16.mxu0 0
    %408 = vmatpush1.bf16.msra.mxu0 0
    %409 = vmatprep.subr.bf16.mxu0 0
    %410 = vmatpush1.bf16.msra.mxu0 0
    %411 = vmatprep.subr.bf16.mxu0 0
    %412 = vmatpush1.bf16.msra.mxu0 0
    %413 = vmatprep.subr.bf16.mxu0 0
    %414 = vmatpush1.bf16.msra.mxu0 0
    %415 = vmatprep.subr.bf16.mxu0 0
    %416 = vmatpush1.bf16.msra.mxu0 0
    %417 = vmatprep.subr.bf16.mxu0 0
    %418 = vmatpush1.bf16.msra.mxu0 0
    %419 = vmatprep.subr.bf16.mxu0 0
    %420 = vmatpush1.bf16.msra.mxu0 0
    %421 = vmatprep.subr.bf16.mxu0 0
    %422 = vmatpush1.bf16.msra.mxu0 0
    %423 = vmatprep.subr.bf16.mxu0 0
    %424 = vmatpush1.bf16.msra.mxu0 0
    %425 = vmatprep.subr.bf16.mxu0 0
    %426 = vmatpush1.bf16.msra.mxu0 0
    %427 = vmatprep.mubr.bf16.mxu0 0
    %428 = vmatmul.mubr.bf16.gmra.mrb[0].mxu0 %v393
    %v429 = vpop.f32.mrb[0].mxu0
    %v430 = vadd.f32 0.0, %v429
    %v431 = vpop.f32.mrb[0].mxu0
    %v432 = vpop.f32.mrb[0].mxu0
    %v433 = vpop.f32.mrb[0].mxu0
    %434 = vdwg.mxu0
    %v435 = vadd.f32 %v390, %v430
    %v436 = vxor.u32 %v435, 2147483648
    %v437 = vmul.f32 %v436, 1.442695
    %v438 = vpow.pop %v437
    %v439 = vadd.f32 %v438, 1.0
    %v440 = vrcp.pop %v439
    %v441 = vmul.f32 1.0, %v440
    %v442 = vtanh.pop %v435
    %444 = vrot.lane.b32.xlu0 %v375, 32
    %v445 = vpop.permute.xlu0 %444
    %v447 = vmul.f32 %v441, %v445
    %449 = vrot.lane.b32.xlu0 %v442, 32
    %v450 = vpop.permute.xlu0 %449
    %v452 = vmul.f32 %v441, %v450
    %454 = vrot.lane.b32.xlu0 %v452, 32
    %v455 = vpop.permute.xlu0 %454
    %v457 = vadd.f32 %v447, %v455
    %v458 = vtanh.pop %v457
    %460 = vrot.lane.b32.xlu0 %v458, 32
    %v461 = vpop.permute.xlu0 %460
    %v463 = vmul.f32 %v441, %v461
    %v464 = vstv %s387
    %vm465 = vcmp.gt.s32.totalorder %v47, %v464
    %v466 = vsel %vm465, 1, 0
    %467 = vset.pattern.permute.xlu0 0
    %468 = vperm.xlu0 %467, %v466
    %v469 = vpop.permute.xlu0 %468
    %vm470 = vcmp.eq.s32.totalorder %v469, 1
    %vm471 = vmor %vm146, %vm470
    %473 = vrot.lane.b32.xlu0 %v463, 64
    %v474 = vpop.permute.xlu0 %473
    %v476 = vsel %vm471, %v474, 0.0
    %478 = vrot.lane.b32.xlu0 %v457, 96
    %v479 = vpop.permute.xlu0 %478
    %v481 = vsel %vm471, %v479, 0.0
    %s482 = smul.u32 %s386, 8
    %s483 = scalar_lea.vmem [#allocation4], %s482
    %484 = vst.msk [vmem:[%s483] sm:$0xff] %vm165, %v476
    %486 = vrot.lane.b32.xlu0 %v476, 112
    %v487 = vpop.permute.xlu0 %486
    %s489 = smul.u32 %s387, 8
    %s490 = scalar_lea.vmem [#allocation5], %s489
    %491 = vst.msk [vmem:[%s490] sm:$0xff] %vm165, %v487
    %s492 = sadd.s32 %s53, 4
    %s493 = ssub.s32 3, %s53
    %s494 = scalar_lea.vmem [#allocation6], 16
    %v495 = vld [vmem:[%s494] sm:$0xf]
    %v496 = vunpack.c.l.bf16 %v495
    %v497 = vpack.c.bf16 %v476, %v476
    %v499 = vsel %vm70, %v497, 0
    %501 = vmatprep.subr.bf16.mxu0 0
    %502 = vmatpush1.bf16.msra.mxu0 %v66
    %503 = vmatprep.subr.bf16.mxu0 0
    %504 = vmatpush1.bf16.msra.mxu0 %v67
    %505 = vmatprep.subr.bf16.mxu0 0
    %506 = vmatpush1.bf16.msra.mxu0 0
    %507 = vmatprep.subr.bf16.mxu0 0
    %508 = vmatpush1.bf16.msra.mxu0 0
    %509 = vmatprep.subr.bf16.mxu0 0
    %510 = vmatpush1.bf16.msra.mxu0 0
    %511 = vmatprep.subr.bf16.mxu0 0
    %512 = vmatpush1.bf16.msra.mxu0 0
    %513 = vmatprep.subr.bf16.mxu0 0
    %514 = vmatpush1.bf16.msra.mxu0 0
    %515 = vmatprep.subr.bf16.mxu0 0
    %516 = vmatpush1.bf16.msra.mxu0 0
    %517 = vmatprep.subr.bf16.mxu0 0
    %518 = vmatpush1.bf16.msra.mxu0 0
    %519 = vmatprep.subr.bf16.mxu0 0
    %520 = vmatpush1.bf16.msra.mxu0 0
    %521 = vmatprep.subr.bf16.mxu0 0
    %522 = vmatpush1.bf16.msra.mxu0 0
    %523 = vmatprep.subr.bf16.mxu0 0
    %524 = vmatpush1.bf16.msra.mxu0 0
    %525 = vmatprep.subr.bf16.mxu0 0
    %526 = vmatpush1.bf16.msra.mxu0 0
    %527 = vmatprep.subr.bf16.mxu0 0
    %528 = vmatpush1.bf16.msra.mxu0 0
    %529 = vmatprep.subr.bf16.mxu0 0
    %530 = vmatpush1.bf16.msra.mxu0 0
    %531 = vmatprep.subr.bf16.mxu0 0
    %532 = vmatpush1.bf16.msra.mxu0 0
    %533 = vmatprep.mubr.bf16.mxu0 0
    %534 = vmatmul.mubr.bf16.gmra.mrb[0].mxu0 %v499
    %v535 = vpop.f32.mrb[0].mxu0
    %v536 = vadd.f32 0.0, %v535
    %v537 = vpop.f32.mrb[0].mxu0
    %v538 = vpop.f32.mrb[0].mxu0
    %v539 = vpop.f32.mrb[0].mxu0
    %540 = vdwg.mxu0
    %v541 = vadd.f32 %v496, %v536
    %v542 = vxor.u32 %v541, 2147483648
    %v543 = vmul.f32 %v542, 1.442695
    %v544 = vpow.pop %v543
    %v545 = vadd.f32 %v544, 1.0
    %v546 = vrcp.pop %v545
    %v547 = vmul.f32 1.0, %v546
    %v548 = vtanh.pop %v541
    %550 = vrot.lane.b32.xlu0 %v481, 32
    %v551 = vpop.permute.xlu0 %550
    %v553 = vmul.f32 %v547, %v551
    %555 = vrot.lane.b32.xlu0 %v548, 32
    %v556 = vpop.permute.xlu0 %555
    %v558 = vmul.f32 %v547, %v556
    %560 = vrot.lane.b32.xlu0 %v558, 32
    %v561 = vpop.permute.xlu0 %560
    %v563 = vadd.f32 %v553, %v561
    %v564 = vtanh.pop %v563
    %566 = vrot.lane.b32.xlu0 %v564, 32
    %v567 = vpop.permute.xlu0 %566
    %v569 = vmul.f32 %v547, %v567
    %v570 = vstv %s493
    %vm571 = vcmp.gt.s32.totalorder %v47, %v570
    %v572 = vsel %vm571, 1, 0
    %573 = vset.pattern.permute.xlu0 0
    %574 = vperm.xlu0 %573, %v572
    %v575 = vpop.permute.xlu0 %574
    %vm576 = vcmp.eq.s32.totalorder %v575, 1
    %vm577 = vmor %vm146, %vm576
    %579 = vrot.lane.b32.xlu0 %v569, 64
    %v580 = vpop.permute.xlu0 %579
    %v582 = vsel %vm577, %v580, 0.0
    %584 = vrot.lane.b32.xlu0 %v563, 96
    %v585 = vpop.permute.xlu0 %584
    %v587 = vsel %vm577, %v585, 0.0
    %s588 = smul.u32 %s492, 8
    %s589 = scalar_lea.vmem [#allocation4], %s588
    %590 = vst.msk [vmem:[%s589] sm:$0xff] %vm165, %v582
    %592 = vrot.lane.b32.xlu0 %v582, 112
    %v593 = vpop.permute.xlu0 %592
    %s595 = smul.u32 %s493, 8
    %s596 = scalar_lea.vmem [#allocation5], %s595
    %597 = vst.msk [vmem:[%s596] sm:$0xff] %vm165, %v593
    %s598 = sadd.s32 %s53, 5
    %s599 = ssub.s32 2, %s53
    %s600 = scalar_lea.vmem [#allocation6], 20
    %v601 = vld [vmem:[%s600] sm:$0xf]
    %v602 = vunpack.c.l.bf16 %v601
    %v603 = vpack.c.bf16 %v582, %v582
    %v605 = vsel %vm70, %v603, 0
    %607 = vmatprep.subr.bf16.mxu0 0
    %608 = vmatpush1.bf16.msra.mxu0 %v66
    %609 = vmatprep.subr.bf16.mxu0 0
    %610 = vmatpush1.bf16.msra.mxu0 %v67
    %611 = vmatprep.subr.bf16.mxu0 0
    %612 = vmatpush1.bf16.msra.mxu0 0
    %613 = vmatprep.subr.bf16.mxu0 0
    %614 = vmatpush1.bf16.msra.mxu0 0
    %615 = vmatprep.subr.bf16.mxu0 0
    %616 = vmatpush1.bf16.msra.mxu0 0
    %617 = vmatprep.subr.bf16.mxu0 0
    %618 = vmatpush1.bf16.msra.mxu0 0
    %619 = vmatprep.subr.bf16.mxu0 0
    %620 = vmatpush1.bf16.msra.mxu0 0
    %621 = vmatprep.subr.bf16.mxu0 0
    %622 = vmatpush1.bf16.msra.mxu0 0
    %623 = vmatprep.subr.bf16.mxu0 0
    %624 = vmatpush1.bf16.msra.mxu0 0
    %625 = vmatprep.subr.bf16.mxu0 0
    %626 = vmatpush1.bf16.msra.mxu0 0
    %627 = vmatprep.subr.bf16.mxu0 0
    %628 = vmatpush1.bf16.msra.mxu0 0
    %629 = vmatprep.subr.bf16.mxu0 0
    %630 = vmatpush1.bf16.msra.mxu0 0
    %631 = vmatprep.subr.bf16.mxu0 0
    %632 = vmatpush1.bf16.msra.mxu0 0
    %633 = vmatprep.subr.bf16.mxu0 0
    %634 = vmatpush1.bf16.msra.mxu0 0
    %635 = vmatprep.subr.bf16.mxu0 0
    %636 = vmatpush1.bf16.msra.mxu0 0
    %637 = vmatprep.subr.bf16.mxu0 0
    %638 = vmatpush1.bf16.msra.mxu0 0
    %639 = vmatprep.mubr.bf16.mxu0 0
    %640 = vmatmul.mubr.bf16.gmra.mrb[0].mxu0 %v605
    %v641 = vpop.f32.mrb[0].mxu0
    %v642 = vadd.f32 0.0, %v641
    %v643 = vpop.f32.mrb[0].mxu0
    %v644 = vpop.f32.mrb[0].mxu0
    %v645 = vpop.f32.mrb[0].mxu0
    %646 = vdwg.mxu0
    %v647 = vadd.f32 %v602, %v642
    %v648 = vxor.u32 %v647, 2147483648
    %v649 = vmul.f32 %v648, 1.442695
    %v650 = vpow.pop %v649
    %v651 = vadd.f32 %v650, 1.0
    %v652 = vrcp.pop %v651
    %v653 = vmul.f32 1.0, %v652
    %v654 = vtanh.pop %v647
    %656 = vrot.lane.b32.xlu0 %v587, 32
    %v657 = vpop.permute.xlu0 %656
    %v659 = vmul.f32 %v653, %v657
    %661 = vrot.lane.b32.xlu0 %v654, 32
    %v662 = vpop.permute.xlu0 %661
    %v664 = vmul.f32 %v653, %v662
    %666 = vrot.lane.b32.xlu0 %v664, 32
    %v667 = vpop.permute.xlu0 %666
    %v669 = vadd.f32 %v659, %v667
    %v670 = vtanh.pop %v669
    %672 = vrot.lane.b32.xlu0 %v670, 32
    %v673 = vpop.permute.xlu0 %672
    %v675 = vmul.f32 %v653, %v673
    %v676 = vstv %s599
    %vm677 = vcmp.gt.s32.totalorder %v47, %v676
    %v678 = vsel %vm677, 1, 0
    %679 = vset.pattern.permute.xlu0 0
    %680 = vperm.xlu0 %679, %v678
    %v681 = vpop.permute.xlu0 %680
    %vm682 = vcmp.eq.s32.totalorder %v681, 1
    %vm683 = vmor %vm146, %vm682
    %685 = vrot.lane.b32.xlu0 %v675, 64
    %v686 = vpop.permute.xlu0 %685
    %v688 = vsel %vm683, %v686, 0.0
    %690 = vrot.lane.b32.xlu0 %v669, 96
    %v691 = vpop.permute.xlu0 %690
    %v693 = vsel %vm683, %v691, 0.0
    %s694 = smul.u32 %s598, 8
    %s695 = scalar_lea.vmem [#allocation4], %s694
    %696 = vst.msk [vmem:[%s695] sm:$0xff] %vm165, %v688
    %698 = vrot.lane.b32.xlu0 %v688, 112
    %v699 = vpop.permute.xlu0 %698
    %s701 = smul.u32 %s599, 8
    %s702 = scalar_lea.vmem [#allocation5], %s701
    %703 = vst.msk [vmem:[%s702] sm:$0xff] %vm165, %v699
    %s704 = sadd.s32 %s53, 6
    %s705 = ssub.s32 1, %s53
    %s706 = scalar_lea.vmem [#allocation6], 24
    %v707 = vld [vmem:[%s706] sm:$0xf]
    %v708 = vunpack.c.l.bf16 %v707
    %v709 = vpack.c.bf16 %v688, %v688
    %v711 = vsel %vm70, %v709, 0
    %713 = vmatprep.subr.bf16.mxu0 0
    %714 = vmatpush1.bf16.msra.mxu0 %v66
    %715 = vmatprep.subr.bf16.mxu0 0
    %716 = vmatpush1.bf16.msra.mxu0 %v67
    %717 = vmatprep.subr.bf16.mxu0 0
    %718 = vmatpush1.bf16.msra.mxu0 0
    %719 = vmatprep.subr.bf16.mxu0 0
    %720 = vmatpush1.bf16.msra.mxu0 0
    %721 = vmatprep.subr.bf16.mxu0 0
    %722 = vmatpush1.bf16.msra.mxu0 0
    %723 = vmatprep.subr.bf16.mxu0 0
    %724 = vmatpush1.bf16.msra.mxu0 0
    %725 = vmatprep.subr.bf16.mxu0 0
    %726 = vmatpush1.bf16.msra.mxu0 0
    %727 = vmatprep.subr.bf16.mxu0 0
    %728 = vmatpush1.bf16.msra.mxu0 0
    %729 = vmatprep.subr.bf16.mxu0 0
    %730 = vmatpush1.bf16.msra.mxu0 0
    %731 = vmatprep.subr.bf16.mxu0 0
    %732 = vmatpush1.bf16.msra.mxu0 0
    %733 = vmatprep.subr.bf16.mxu0 0
    %734 = vmatpush1.bf16.msra.mxu0 0
    %735 = vmatprep.subr.bf16.mxu0 0
    %736 = vmatpush1.bf16.msra.mxu0 0
    %737 = vmatprep.subr.bf16.mxu0 0
    %738 = vmatpush1.bf16.msra.mxu0 0
    %739 = vmatprep.subr.bf16.mxu0 0
    %740 = vmatpush1.bf16.msra.mxu0 0
    %741 = vmatprep.subr.bf16.mxu0 0
    %742 = vmatpush1.bf16.msra.mxu0 0
    %743 = vmatprep.subr.bf16.mxu0 0
    %744 = vmatpush1.bf16.msra.mxu0 0
    %745 = vmatprep.mubr.bf16.mxu0 0
    %746 = vmatmul.mubr.bf16.gmra.mrb[0].mxu0 %v711
    %v747 = vpop.f32.mrb[0].mxu0
    %v748 = vadd.f32 0.0, %v747
    %v749 = vpop.f32.mrb[0].mxu0
    %v750 = vpop.f32.mrb[0].mxu0
    %v751 = vpop.f32.mrb[0].mxu0
    %752 = vdwg.mxu0
    %v753 = vadd.f32 %v708, %v748
    %v754 = vxor.u32 %v753, 2147483648
    %v755 = vmul.f32 %v754, 1.442695
    %v756 = vpow.pop %v755
    %v757 = vadd.f32 %v756, 1.0
    %v758 = vrcp.pop %v757
    %v759 = vmul.f32 1.0, %v758
    %v760 = vtanh.pop %v753
    %762 = vrot.lane.b32.xlu0 %v693, 32
    %v763 = vpop.permute.xlu0 %762
    %v765 = vmul.f32 %v759, %v763
    %767 = vrot.lane.b32.xlu0 %v760, 32
    %v768 = vpop.permute.xlu0 %767
    %v770 = vmul.f32 %v759, %v768
    %772 = vrot.lane.b32.xlu0 %v770, 32
    %v773 = vpop.permute.xlu0 %772
    %v775 = vadd.f32 %v765, %v773
    %v776 = vtanh.pop %v775
    %778 = vrot.lane.b32.xlu0 %v776, 32
    %v779 = vpop.permute.xlu0 %778
    %v781 = vmul.f32 %v759, %v779
    %v782 = vstv %s705
    %vm783 = vcmp.gt.s32.totalorder %v47, %v782
    %v784 = vsel %vm783, 1, 0
    %785 = vset.pattern.permute.xlu0 0
    %786 = vperm.xlu0 %785, %v784
    %v787 = vpop.permute.xlu0 %786
    %vm788 = vcmp.eq.s32.totalorder %v787, 1
    %vm789 = vmor %vm146, %vm788
    %791 = vrot.lane.b32.xlu0 %v781, 64
    %v792 = vpop.permute.xlu0 %791
    %v794 = vsel %vm789, %v792, 0.0
    %796 = vrot.lane.b32.xlu0 %v775, 96
    %v797 = vpop.permute.xlu0 %796
    %v799 = vsel %vm789, %v797, 0.0
    %s800 = smul.u32 %s704, 8
    %s801 = scalar_lea.vmem [#allocation4], %s800
    %802 = vst.msk [vmem:[%s801] sm:$0xff] %vm165, %v794
    %804 = vrot.lane.b32.xlu0 %v794, 112
    %v805 = vpop.permute.xlu0 %804
    %s807 = smul.u32 %s705, 8
    %s808 = scalar_lea.vmem [#allocation5], %s807
    %809 = vst.msk [vmem:[%s808] sm:$0xff] %vm165, %v805
    %s810 = sadd.s32 %s53, 7
    %s811 = ssub.s32 0, %s53
    %s812 = scalar_lea.vmem [#allocation6], 28
    %v813 = vld [vmem:[%s812] sm:$0xf]
    %v814 = vunpack.c.l.bf16 %v813
    %v815 = vpack.c.bf16 %v794, %v794
    %v817 = vsel %vm70, %v815, 0
    %819 = vmatprep.subr.bf16.mxu0 0
    %820 = vmatpush1.bf16.msra.mxu0 %v66
    %821 = vmatprep.subr.bf16.mxu0 0
    %822 = vmatpush1.bf16.msra.mxu0 %v67
    %823 = vmatprep.subr.bf16.mxu0 0
    %824 = vmatpush1.bf16.msra.mxu0 0
    %825 = vmatprep.subr.bf16.mxu0 0
    %826 = vmatpush1.bf16.msra.mxu0 0
    %827 = vmatprep.subr.bf16.mxu0 0
    %828 = vmatpush1.bf16.msra.mxu0 0
    %829 = vmatprep.subr.bf16.mxu0 0
    %830 = vmatpush1.bf16.msra.mxu0 0
    %831 = vmatprep.subr.bf16.mxu0 0
    %832 = vmatpush1.bf16.msra.mxu0 0
    %833 = vmatprep.subr.bf16.mxu0 0
    %834 = vmatpush1.bf16.msra.mxu0 0
    %835 = vmatprep.subr.bf16.mxu0 0
    %836 = vmatpush1.bf16.msra.mxu0 0
    %837 = vmatprep.subr.bf16.mxu0 0
    %838 = vmatpush1.bf16.msra.mxu0 0
    %839 = vmatprep.subr.bf16.mxu0 0
    %840 = vmatpush1.bf16.msra.mxu0 0
    %841 = vmatprep.subr.bf16.mxu0 0
    %842 = vmatpush1.bf16.msra.mxu0 0
    %843 = vmatprep.subr.bf16.mxu0 0
    %844 = vmatpush1.bf16.msra.mxu0 0
    %845 = vmatprep.subr.bf16.mxu0 0
    %846 = vmatpush1.bf16.msra.mxu0 0
    %847 = vmatprep.subr.bf16.mxu0 0
    %848 = vmatpush1.bf16.msra.mxu0 0
    %849 = vmatprep.subr.bf16.mxu0 0
    %850 = vmatpush1.bf16.msra.mxu0 0
    %851 = vmatprep.mubr.bf16.mxu0 0
    %852 = vmatmul.mubr.bf16.gmra.mrb[0].mxu0 %v817
    %v853 = vpop.f32.mrb[0].mxu0
    %v854 = vadd.f32 0.0, %v853
    %v855 = vpop.f32.mrb[0].mxu0
    %v856 = vpop.f32.mrb[0].mxu0
    %v857 = vpop.f32.mrb[0].mxu0
    %858 = vdwg.mxu0
    %v859 = vadd.f32 %v814, %v854
    %v860 = vxor.u32 %v859, 2147483648
    %v861 = vmul.f32 %v860, 1.442695
    %v862 = vpow.pop %v861
    %v863 = vadd.f32 %v862, 1.0
    %v864 = vrcp.pop %v863
    %v865 = vmul.f32 1.0, %v864
    %v866 = vtanh.pop %v859
    %868 = vrot.lane.b32.xlu0 %v799, 32
    %v869 = vpop.permute.xlu0 %868
    %v871 = vmul.f32 %v865, %v869
    %873 = vrot.lane.b32.xlu0 %v866, 32
    %v874 = vpop.permute.xlu0 %873
    %v876 = vmul.f32 %v865, %v874
    %878 = vrot.lane.b32.xlu0 %v876, 32
    %v879 = vpop.permute.xlu0 %878
    %v881 = vadd.f32 %v871, %v879
    %v882 = vtanh.pop %v881
    %884 = vrot.lane.b32.xlu0 %v882, 32
    %v885 = vpop.permute.xlu0 %884
    %v887 = vmul.f32 %v865, %v885
    %v888 = vstv %s811
    %vm889 = vcmp.gt.s32.totalorder %v47, %v888
    %v890 = vsel %vm889, 1, 0
    %891 = vset.pattern.permute.xlu0 0
    %892 = vperm.xlu0 %891, %v890
    %v893 = vpop.permute.xlu0 %892
    %vm894 = vcmp.eq.s32.totalorder %v893, 1
    %vm895 = vmor %vm146, %vm894
    %897 = vrot.lane.b32.xlu0 %v887, 64
    %v898 = vpop.permute.xlu0 %897
    %v900 = vsel %vm895, %v898, 0.0
    %902 = vrot.lane.b32.xlu0 %v881, 96
    %v903 = vpop.permute.xlu0 %902
    %v905 = vsel %vm895, %v903, 0.0
    %s906 = smul.u32 %s810, 8
    %s907 = scalar_lea.vmem [#allocation4], %s906
    %908 = vst.msk [vmem:[%s907] sm:$0xff] %vm165, %v900
    %910 = vrot.lane.b32.xlu0 %v900, 112
    %v911 = vpop.permute.xlu0 %910
    %s913 = smul.u32 %s811, 8
    %s914 = scalar_lea.vmem [#allocation5], %s913
    %915 = vst.msk [vmem:[%s914] sm:$0xff] %vm165, %v911
    %916 = vst.msk [vmem:[#allocation2] sm:$0xff] %vm70, %v900
    %917 = vst.msk [vmem:[#allocation3] sm:$0xff] %vm70, %v905
    // Predicated region
    $region30: #{tpu_custom_call.1} parent=1 // pred_check
      %p918 = pneg %p36
    $region31: #{tpu_custom_call.1} parent=1 // pred_check_branch
      %920 = sbr.rel (%p918) target = $region33
    $region32: #{tpu_custom_call.1} parent=1 // pred_region
      %v921 = vld [vmem:[%s4] sm:$0x1]
      %v922 = vld [vmem:[#allocation4] sm:$0xff]
      %v923 = vld [vmem:[#allocation4 + $0x8] sm:$0xff]
      %v924 = vld [vmem:[#allocation4 + $0x10] sm:$0xff]
      %v925 = vld [vmem:[#allocation4 + $0x18] sm:$0xff]
      %v926 = vld [vmem:[#allocation4 + $0x20] sm:$0xff]
      %v927 = vld [vmem:[#allocation4 + $0x28] sm:$0xff]
      %v928 = vld [vmem:[#allocation4 + $0x30] sm:$0xff]
      %v929 = vld [vmem:[#allocation4 + $0x38] sm:$0xff]
      %v931 = vlaneseq
      %v932 = vshrl.u32 %v931, 7
      %v933 = vsub.s32 0, %v932
      %v934 = vrot.slane %v921, %v933
      %v936 = vmul.f32 %v922, %v934
      %v937 = vmul.f32 %v923, %v934
      %v938 = vmul.f32 %v924, %v934
      %v939 = vmul.f32 %v925, %v934
      %v940 = vmul.f32 %v926, %v934
      %v941 = vmul.f32 %v927, %v934
      %v942 = vmul.f32 %v928, %v934
      %v943 = vmul.f32 %v929, %v934
      %v944 = vsel %vm165, %v936, 0.0
      %945 = vadd.xlane.f32.xlu0 %v944
      %v946 = vpop.xlane.xlu0 %945
      %v947 = vsel %vm165, %v937, 0.0
      %948 = vadd.xlane.f32.xlu0 %v947
      %v949 = vpop.xlane.xlu0 %948
      %v950 = vsel %vm165, %v938, 0.0
      %951 = vadd.xlane.f32.xlu0 %v950
      %v952 = vpop.xlane.xlu0 %951
      %v953 = vsel %vm165, %v939, 0.0
      %954 = vadd.xlane.f32.xlu0 %v953
      %v955 = vpop.xlane.xlu0 %954
      %v956 = vsel %vm165, %v940, 0.0
      %957 = vadd.xlane.f32.xlu0 %v956
      %v958 = vpop.xlane.xlu0 %957
      %v959 = vsel %vm165, %v941, 0.0
      %960 = vadd.xlane.f32.xlu0 %v959
      %v961 = vpop.xlane.xlu0 %960
      %v962 = vsel %vm165, %v942, 0.0
      %963 = vadd.xlane.f32.xlu0 %v962
      %v964 = vpop.xlane.xlu0 %963
      %v965 = vsel %vm165, %v943, 0.0
      %966 = vadd.xlane.f32.xlu0 %v965
      %v967 = vpop.xlane.xlu0 %966
      %v968 = vld [vmem:[#allocation5] sm:$0xff]
      %v969 = vld [vmem:[#allocation5 + $0x8] sm:$0xff]
      %v970 = vld [vmem:[#allocation5 + $0x10] sm:$0xff]
      %v971 = vld [vmem:[#allocation5 + $0x18] sm:$0xff]
      %v972 = vld [vmem:[#allocation5 + $0x20] sm:$0xff]
      %v973 = vld [vmem:[#allocation5 + $0x28] sm:$0xff]
      %v974 = vld [vmem:[#allocation5 + $0x30] sm:$0xff]
      %v975 = vld [vmem:[#allocation5 + $0x38] sm:$0xff]
      %976 = vrot.lane.b32.xlu0 %v934, 112
      %v977 = vpop.permute.xlu0 %976
      %v979 = vmul.f32 %v968, %v977
      %v980 = vmul.f32 %v969, %v977
      %v981 = vmul.f32 %v970, %v977
      %v982 = vmul.f32 %v971, %v977
      %v983 = vmul.f32 %v972, %v977
      %v984 = vmul.f32 %v973, %v977
      %v985 = vmul.f32 %v974, %v977
      %v986 = vmul.f32 %v975, %v977
      %v987 = vsel %vm165, %v979, 0.0
      %988 = vadd.xlane.f32.xlu0 %v987
      %v989 = vpop.xlane.xlu0 %988
      %v990 = vsel %vm165, %v980, 0.0
      %991 = vadd.xlane.f32.xlu0 %v990
      %v992 = vpop.xlane.xlu0 %991
      %v993 = vsel %vm165, %v981, 0.0
      %994 = vadd.xlane.f32.xlu0 %v993
      %v995 = vpop.xlane.xlu0 %994
      %v996 = vsel %vm165, %v982, 0.0
      %997 = vadd.xlane.f32.xlu0 %v996
      %v998 = vpop.xlane.xlu0 %997
      %v999 = vsel %vm165, %v983, 0.0
      %1000 = vadd.xlane.f32.xlu0 %v999
      %v1001 = vpop.xlane.xlu0 %1000
      %v1002 = vsel %vm165, %v984, 0.0
      %1003 = vadd.xlane.f32.xlu0 %v1002
      %v1004 = vpop.xlane.xlu0 %1003
      %v1005 = vsel %vm165, %v985, 0.0
      %1006 = vadd.xlane.f32.xlu0 %v1005
      %v1007 = vpop.xlane.xlu0 %1006
      %v1008 = vsel %vm165, %v986, 0.0
      %1009 = vadd.xlane.f32.xlu0 %v1008
      %v1010 = vpop.xlane.xlu0 %1009
      %v1011 = vadd.f32 %v946, %v989
      %v1012 = vadd.f32 %v949, %v992
      %v1013 = vadd.f32 %v952, %v995
      %v1014 = vadd.f32 %v955, %v998
      %v1015 = vadd.f32 %v958, %v1001
      %v1016 = vadd.f32 %v961, %v1004
      %v1017 = vadd.f32 %v964, %v1007
      %v1018 = vadd.f32 %v967, %v1010
      %v1019 = vlaneseq
      %v1020 = vshrl.u32 %v1019, 7
      %v1021 = vld [vmem:[%s2] sm:$0x1]
      %v1022 = vlaneseq
      %v1023 = vshrl.u32 %v1022, 7
      %v1024 = vsub.s32 0, %v1023
      %v1025 = vrot.slane %v1021, %v1024
      %vm1026 = vcmp.lt.s32.totalorder %v1020, %v1025
      %v1035 = vlaneseq
      %v1036 = vshrl.u32 %v1035, 7
      %v1037 = vsub.s32 %v49, %v1036
      %v1038 = vrot.slane %v1011, %v1037
      %v1039 = vlaneseq
      %v1040 = vshrl.u32 %v1039, 7
      %v1041 = vsub.s32 %v49, %v1040
      %v1042 = vrot.slane %v1012, %v1041
      %v1043 = vlaneseq
      %v1044 = vshrl.u32 %v1043, 7
      %v1045 = vsub.s32 %v49, %v1044
      %v1046 = vrot.slane %v1013, %v1045
      %v1047 = vlaneseq
      %v1048 = vshrl.u32 %v1047, 7
      %v1049 = vsub.s32 %v49, %v1048
      %v1050 = vrot.slane %v1014, %v1049
      %v1051 = vlaneseq
      %v1052 = vshrl.u32 %v1051, 7
      %v1053 = vsub.s32 %v49, %v1052
      %v1054 = vrot.slane %v1015, %v1053
      %v1055 = vlaneseq
      %v1056 = vshrl.u32 %v1055, 7
      %v1057 = vsub.s32 %v49, %v1056
      %v1058 = vrot.slane %v1016, %v1057
      %v1059 = vlaneseq
      %v1060 = vshrl.u32 %v1059, 7
      %v1061 = vsub.s32 %v49, %v1060
      %v1062 = vrot.slane %v1017, %v1061
      %v1063 = vlaneseq
      %v1064 = vshrl.u32 %v1063, 7
      %v1065 = vsub.s32 %v49, %v1064
      %v1066 = vrot.slane %v1018, %v1065
      %vm1067 = vcmask 1041409
      %v1068 = vsel %vm1067, %v1042, %v1038
      %vm1069 = vcmask 1042434
      %v1070 = vsel %vm1069, %v1046, %v1068
      %vm1071 = vcmask 1043459
      %v1072 = vsel %vm1071, %v1050, %v1070
      %vm1073 = vcmask 1044484
      %v1074 = vsel %vm1073, %v1054, %v1072
      %vm1075 = vcmask 1045509
      %v1076 = vsel %vm1075, %v1058, %v1074
      %vm1077 = vcmask 1046534
      %v1078 = vsel %vm1077, %v1062, %v1076
      %vm1079 = vcmask 1047559
      %v1080 = vsel %vm1079, %v1066, %v1078
      %v1082 = vsel %vm1026, %v1080, -inf
      %vm1083 = vcmask 64512
      %v1084 = vsel %vm1083, %v1082, -inf
      %1085 = vmax.xlane.f32.xlu0 %v1084
      %v1086 = vpop.xlane.xlu0 %1085
      %v1087 = vmax.f32 %v1086, -1e+30
      %v1088 = vsub.f32 %v1082, %v1087
      %v1089 = vmul.f32 %v1088, 1.442695
      %v1090 = vpow.pop %v1089
      %v1091 = vsel %vm1083, %v1090, 0.0
      %1092 = vadd.xlane.f32.xlu0 %v1091
      %v1093 = vpop.xlane.xlu0 %1092
      %v1094 = vmax.f32 %v1093, 1e-30
      %v1095 = vrcp.pop %v1094
      %v1096 = vmul.f32 %v1090, %v1095
      %v1097 = vcvt.s32.f32 %v1021
      %v1098 = vmax.f32 %v1097, 1.0
      %v1099 = vmul.f32 %v1096, 0.75
      %v1100 = vrcp.pop %v1098
      %v1101 = vmul.f32 0.25, %v1100
      %v1103 = vlaneseq
      %v1104 = vshrl.u32 %v1103, 7
      %v1105 = vsub.s32 0, %v1104
      %v1106 = vrot.slane %v1101, %v1105
      %v1108 = vadd.f32 %v1099, %v1106
      %vm1109 = vcmp.gt.f32.partialorder %v1093, 0.0
      %v1110 = vsel %vm1109, 1, 0
      %vm1111 = vcmp.eq.s32.totalorder %v1110, 1
      %v1112 = vsel %vm1111, %v1108, 0.0
      %1113 = vst.msk [vmem:[#allocation9] sm:$0xff] %vm1083, %v1112
    $region33: #{tpu_custom_call.1} parent=1 // pred_fallthru
      _
    // Predicated region
    $region34: #{tpu_custom_call.1} parent=1 // pred_check
      _
    $region35: #{tpu_custom_call.1} parent=1 // pred_check_branch
      %1115 = sbr.rel (0) target = $region37
    $region36: #{tpu_custom_call.1} parent=1 // pred_region
      %s1117 = ssub.s32 128, 128
      %1118 = vsyncadd [#allocation8], %s1117
      %s1120 = sshll.u32 [#allocation9], 4
      %s1121 = int_to_ptr.vmem [resolvable:$true] %s1120
      %1123 = dma.vmem_to_hbm [thread:$0]  %s1121, 128, %s5, [#allocation8]
    $region37: #{tpu_custom_call.1} parent=1 // pred_fallthru
      _
    // Predicated region
    $region38: #{tpu_custom_call.1} parent=1 // pred_check
      _
    $region39: #{tpu_custom_call.1} parent=1 // pred_check_branch
      %1125 = sbr.rel (0) target = $region41
    $region40: #{tpu_custom_call.1} parent=1 // pred_region
      %1126 = dma.done [#allocation8], 128
    $region41: #{tpu_custom_call.1} parent=1 // pred_fallthru
      _
    %1127 = vsyncpa [#allocation7], 1
    %1128 = vsyncpa [#allocation8], 1

</llo_original>
